<compile_context>
chip_gen: v5e
topology: v5e:2x2
jax: 0.10.0
libtpu: 0.0.40
codegen_flags: <defaults>
</compile_context>

<pallas_src>
import math
import jax
import jax.numpy as jnp
from jax import lax
from jax.experimental import pallas as pl
from jax.experimental.pallas import tpu as pltpu


def self_attention_kernel(x_ref, qin_ref,
                          wq_ref, bq_ref, wkv_ref, bkv_ref,
                          wmlp_ref, bmlp_ref,
                          out_ref, attn_ref):
    Bblk, S, D = x_ref.shape
    Sq = qin_ref.shape[1]

    # Flatten batch x sequence so projections / MLP see MXU-friendly M >= 256.
    x2 = x_ref[...].reshape(Bblk * S, D)          # (Bblk*S, D)
    q2 = qin_ref[...].reshape(Bblk * Sq, D)       # (Bblk*Sq, D)

    inv_sqrt_d = jnp.float32(1.0 / math.sqrt(D))  # D == x.size(-1) in torch ref

    # Q projection; fold the 1/sqrt(D) score scale into q (after the bias add).
    q = (jnp.dot(q2, wq_ref[...], preferred_element_type=jnp.float32)
         + bq_ref[...]) * inv_sqrt_d

    # Fused K|V projection: one (Bblk*S, D) x (D, 2D) matmul.
    kv = jnp.dot(x2, wkv_ref[...], preferred_element_type=jnp.float32) + bkv_ref[...]
    k = kv[:, :D]
    v = kv[:, D:]

    qb = q.reshape(Bblk, Sq, D)
    kb = k.reshape(Bblk, S, D)
    vb = v.reshape(Bblk, S, D)

    # scores = (q/sqrt(D)) @ k^T, expressed as a transposed contraction
    # (no explicit k.T -> no XLU transpose before the MXU push).
    scores = lax.dot_general(
        qb, kb,
        dimension_numbers=(((2,), (2,)), ((0,), (0,))),
        preferred_element_type=jnp.float32)       # (Bblk, Sq, S)

    # softmax over keys
    m = jnp.max(scores, axis=-1, keepdims=True)
    e = jnp.exp(scores - m)
    w = e * pl.reciprocal(jnp.sum(e, axis=-1, keepdims=True), approx=True)
    attn_ref[...] = w.astype(attn_ref.dtype)

    attn_out = lax.dot_general(
        w, vb,
        dimension_numbers=(((2,), (1,)), ((0,), (0,))),
        preferred_element_type=jnp.float32)       # (Bblk, Sq, D)

    # MLP: (Linear -> ReLU) x 3, on the flattened (Bblk*Sq, D) matrix.
    h = attn_out.reshape(Bblk * Sq, D)
    for i in range(3):
        h = jnp.maximum(
            jnp.dot(h, wmlp_ref[i], preferred_element_type=jnp.float32)
            + bmlp_ref[i], 0.0)
    out_ref[...] = h.reshape(Bblk, Sq, D).astype(out_ref.dtype)


def self_attention(x, query, params, *, block_batch=None, attn_dtype=jnp.float32):
    """x: (B, S, D), query: (B, Sq, D).

    Returns (result (B, Sq, D) f32, attention_weights (B, Sq, S) attn_dtype).
    """
    wq, bq, wkv, bkv, wmlp, bmlp = params
    B, S, D = x.shape
    Sq = query.shape[1]

    if block_batch is None:
        # Enough rows per step to fill the MXU M dimension (~256), but keep at
        # least two grid steps so both v7x TensorCores get work.
        rows_target = 256
        block_batch = max(1, min(B, rows_target // max(Sq, 1)))
        if B >= 2:
            block_batch = min(block_batch, pl.cdiv(B, 2))
        block_batch = max(block_batch, 1)

    grid_b = pl.cdiv(B, block_batch)
    Bp = grid_b * block_batch
    if Bp != B:
        pad = Bp - B
        x = jnp.pad(x, ((0, pad), (0, 0), (0, 0)))
        query = jnp.pad(query, ((0, pad), (0, 0), (0, 0)))

    def const_spec(shape):
        return pl.BlockSpec(shape, lambda b, _n=len(shape): (0,) * _n)

    in_specs = [
        pl.BlockSpec((block_batch, S, D), lambda b: (b, 0, 0)),    # x
        pl.BlockSpec((block_batch, Sq, D), lambda b: (b, 0, 0)),   # query
        const_spec(wq.shape), const_spec(bq.shape),
        const_spec(wkv.shape), const_spec(bkv.shape),
        const_spec(wmlp.shape), const_spec(bmlp.shape),
    ]
    out_specs = [
        pl.BlockSpec((block_batch, Sq, D), lambda b: (b, 0, 0)),   # result
        pl.BlockSpec((block_batch, Sq, S), lambda b: (b, 0, 0)),   # attn weights
    ]
    out_shape = (
        jax.ShapeDtypeStruct((Bp, Sq, D), jnp.float32),
        jax.ShapeDtypeStruct((Bp, Sq, S), attn_dtype),
    )

    attn_itemsize = jnp.dtype(attn_dtype).itemsize

    # Advisory cost estimate for XLA's scheduler.
    flops = int(2 * B * (D * D * (Sq + 2 * S)     # q + fused kv projections
                         + 2 * Sq * S * D         # scores + attn @ v
                         + 3 * Sq * D * D))       # MLP
    transcendentals = int(B * Sq * S)             # exp in softmax
    weight_bytes = int(4 * (wq.size + bq.size + wkv.size + bkv.size
                            + wmlp.size + bmlp.size))
    bytes_accessed = int(4 * (B * S * D + 2 * B * Sq * D)
                         + attn_itemsize * B * Sq * S + weight_bytes)
    cost = pl.CostEstimate(flops=flops, transcendentals=transcendentals,
                           bytes_accessed=bytes_accessed)

    # Tile-sized VMEM budget (double-buffered I/O blocks + weights + live temps).
    io_bytes = (4 * block_batch * (S * D + 2 * Sq * D)
                + attn_itemsize * block_batch * Sq * S)
    temp_bytes = 4 * block_batch * (Sq * D + 2 * S * D + 2 * Sq * S + 2 * Sq * D)
    vmem_est = 2 * (io_bytes + weight_bytes) + temp_bytes
    vmem_limit = int(min(max(2 * vmem_est, 32 * 1024 * 1024), 60 * 1024 * 1024))

    result, attn = pl.pallas_call(
        self_attention_kernel,
        out_shape=out_shape,
        grid_spec=pltpu.PrefetchScalarGridSpec(
            num_scalar_prefetch=0,
            grid=(grid_b,),
            in_specs=in_specs,
            out_specs=out_specs,
        ),
        compiler_params=pltpu.CompilerParams(
            dimension_semantics=("parallel",),
            vmem_limit_bytes=vmem_limit),
        cost_estimate=cost,
    )(x, query, wq, bq, wkv, bkv, wmlp, bmlp)

    if Bp != B:
        result, attn = result[:B], attn[:B]
    return result, attn


def init_params(key, dim):
    """Deterministic init mirroring the PyTorch module.

    q/k/v: kaiming_uniform_(a=sqrt(5)) -> U(-1/sqrt(dim), 1/sqrt(dim)); bias 0.
    MLP linears: default nn.Linear init -> weight & bias U(-1/sqrt(dim), 1/sqrt(dim)).
    Weights returned pre-transposed (in, out) and packed:
      wq (D,D), bq (1,D), wkv (D,2D), bkv (1,2D), wmlp (3,D,D), bmlp (3,1,D).
    """
    bound = 1.0 / math.sqrt(dim)
    keys = jax.random.split(key, 9)
    u = lambda k, shape: jax.random.uniform(k, shape, jnp.float32, -bound, bound)

    wq = u(keys[0], (dim, dim))
    bq = jnp.zeros((1, dim), jnp.float32)
    wk = u(keys[1], (dim, dim))
    wv = u(keys[2], (dim, dim))
    wkv = jnp.concatenate([wk, wv], axis=1)                 # (D, 2D)
    bkv = jnp.zeros((1, 2 * dim), jnp.float32)
    w1 = u(keys[3], (dim, dim)); b1 = u(keys[4], (1, dim))
    w2 = u(keys[5], (dim, dim)); b2 = u(keys[6], (1, dim))
    w3 = u(keys[7], (dim, dim)); b3 = u(keys[8], (1, dim))
    wmlp = jnp.stack([w1, w2, w3], axis=0)                  # (3, D, D)
    bmlp = jnp.stack([b1, b2, b3], axis=0)                  # (3, 1, D)
    return (wq, bq, wkv, bkv, wmlp, bmlp)


def reference(x, query, params):
    wq, bq, wkv, bkv, wmlp, bmlp = params
    D = x.shape[-1]
    q = query @ wq + bq
    k = x @ wkv[:, :D] + bkv[:, :D]
    v = x @ wkv[:, D:] + bkv[:, D:]
    scores = jnp.einsum("bqd,bkd->bqk", q, k) / jnp.sqrt(jnp.float32(D))
    w = jax.nn.softmax(scores, axis=-1)
    h = jnp.einsum("bqk,bkd->bqd", w, v)
    for i in range(3):
        h = jax.nn.relu(h @ wmlp[i] + bmlp[i])
    return h, w


if __name__ == "__main__":
    # Lane/sublane-aligned small shapes: last dims multiples of 128 -> dense
    # vector stores; B even -> even grid split across v7x TensorCores.
    B, S, Sq, D = 8, 128, 128, 128
    key = jax.random.PRNGKey(0)
    kx, kq, kp = jax.random.split(key, 3)

    x = jax.random.normal(kx, (B, S, D), jnp.float32)
    query = jax.random.normal(kq, (B, Sq, D), jnp.float32)
    params = init_params(kp, D)

    result, attn = jax.block_until_ready(self_attention(x, query, params))

    ref_result, ref_attn = reference(x, query, params)
    assert result.shape == (B, Sq, D) and attn.shape == (B, Sq, S)
    # Tolerance relaxed from 1e-5 to cover pl.reciprocal(approx=True) in softmax.
    assert jnp.allclose(result, ref_result, atol=2e-3, rtol=2e-3)
    assert jnp.allclose(attn, ref_attn, atol=2e-3, rtol=2e-3)

    print("KERNEL_OK")
</pallas_src>

<mosaic_0001>
module attributes {stable_mosaic.version = 11 : i64} {
  func.func @self_attention_kernel(%arg0: i32, %arg1: memref<2x128x128xf32, #tpu.memory_space<vmem>>, %arg2: memref<2x128x128xf32, #tpu.memory_space<vmem>>, %arg3: memref<128x128xf32, #tpu.memory_space<vmem>>, %arg4: memref<1x128xf32, #tpu.memory_space<vmem>>, %arg5: memref<128x256xf32, #tpu.memory_space<vmem>>, %arg6: memref<1x256xf32, #tpu.memory_space<vmem>>, %arg7: memref<3x128x128xf32, #tpu.memory_space<vmem>>, %arg8: memref<3x1x128xf32, #tpu.memory_space<vmem>>, %arg9: memref<2x128x128xf32, #tpu.memory_space<vmem>>, %arg10: memref<2x128x128xf32, #tpu.memory_space<vmem>>) attributes {dimension_semantics = [#tpu.dimension_semantics<parallel>], iteration_bounds = array<i64: 4>, scalar_prefetch = 0 : i64, scratch_operands = 0 : i64, tpu.core_type = #tpu.core_type<tc>, window_params = [{transform_indices = @transform_0, window_bounds = array<i64: 2, 128, 128>}, {transform_indices = @transform_1, window_bounds = array<i64: 2, 128, 128>}, {pipeline_mode = #tpu.pipeline_mode<synchronous>, transform_indices = @transform_2, window_bounds = array<i64: 128, 128>}, {pipeline_mode = #tpu.pipeline_mode<synchronous>, transform_indices = @transform_3, window_bounds = array<i64: 1, 128>}, {pipeline_mode = #tpu.pipeline_mode<synchronous>, transform_indices = @transform_4, window_bounds = array<i64: 128, 256>}, {pipeline_mode = #tpu.pipeline_mode<synchronous>, transform_indices = @transform_5, window_bounds = array<i64: 1, 256>}, {pipeline_mode = #tpu.pipeline_mode<synchronous>, transform_indices = @transform_6, window_bounds = array<i64: 3, 128, 128>}, {pipeline_mode = #tpu.pipeline_mode<synchronous>, transform_indices = @transform_7, window_bounds = array<i64: 3, 1, 128>}, {transform_indices = @transform_8, window_bounds = array<i64: 2, 128, 128>}, {transform_indices = @transform_9, window_bounds = array<i64: 2, 128, 128>}]} {
    %c0 = arith.constant 0 : index
    %c0_0 = arith.constant 0 : index
    %c0_1 = arith.constant 0 : index
    %0 = vector.load %arg1[%c0, %c0_0, %c0_1] : memref<2x128x128xf32, #tpu.memory_space<vmem>>, vector<2x128x128xf32>
    %1 = vector.shape_cast %0 : vector<2x128x128xf32> to vector<256x128xf32>
    %c0_2 = arith.constant 0 : index
    %c0_3 = arith.constant 0 : index
    %c0_4 = arith.constant 0 : index
    %2 = vector.load %arg2[%c0_2, %c0_3, %c0_4] : memref<2x128x128xf32, #tpu.memory_space<vmem>>, vector<2x128x128xf32>
    %3 = vector.shape_cast %2 : vector<2x128x128xf32> to vector<256x128xf32>
    %c0_5 = arith.constant 0 : index
    %c0_6 = arith.constant 0 : index
    %4 = vector.load %arg3[%c0_5, %c0_6] : memref<128x128xf32, #tpu.memory_space<vmem>>, vector<128x128xf32>
    %cst = arith.constant dense<0.000000e+00> : vector<256x128xf32>
    %5 = tpu.matmul %3, %4, %cst {dimension_numbers = #tpu.dot_dimension_numbers<[1], [0], [0], [1], [0, 0, 1, 1], [], []>} : vector<256x128xf32>, vector<128x128xf32>, vector<256x128xf32> -> vector<256x128xf32>
    %c0_7 = arith.constant 0 : index
    %c0_8 = arith.constant 0 : index
    %6 = vector.load %arg4[%c0_7, %c0_8] : memref<1x128xf32, #tpu.memory_space<vmem>>, vector<1x128xf32>
    %7 = vector.broadcast %6 : vector<1x128xf32> to vector<256x128xf32>
    %8 = arith.addf %5, %7 : vector<256x128xf32>
    %cst_9 = arith.constant 0.0883883461 : f32
    %9 = vector.broadcast %cst_9 : f32 to vector<256x128xf32>
    %10 = arith.mulf %8, %9 : vector<256x128xf32>
    %c0_10 = arith.constant 0 : index
    %c0_11 = arith.constant 0 : index
    %11 = vector.load %arg5[%c0_10, %c0_11] : memref<128x256xf32, #tpu.memory_space<vmem>>, vector<128x256xf32>
    %cst_12 = arith.constant dense<0.000000e+00> : vector<256x256xf32>
    %12 = tpu.matmul %1, %11, %cst_12 {dimension_numbers = #tpu.dot_dimension_numbers<[1], [0], [0], [1], [0, 0, 1, 1], [], []>} : vector<256x128xf32>, vector<128x256xf32>, vector<256x256xf32> -> vector<256x256xf32>
    %c0_13 = arith.constant 0 : index
    %c0_14 = arith.constant 0 : index
    %13 = vector.load %arg6[%c0_13, %c0_14] : memref<1x256xf32, #tpu.memory_space<vmem>>, vector<1x256xf32>
    %14 = vector.broadcast %13 : vector<1x256xf32> to vector<256x256xf32>
    %15 = arith.addf %12, %14 : vector<256x256xf32>
    %16 = vector.extract_strided_slice %15 {offsets = [0, 0], sizes = [256, 128], strides = [1, 1]} : vector<256x256xf32> to vector<256x128xf32>
    %17 = vector.extract_strided_slice %15 {offsets = [0, 128], sizes = [256, 128], strides = [1, 1]} : vector<256x256xf32> to vector<256x128xf32>
    %18 = vector.shape_cast %10 : vector<256x128xf32> to vector<2x128x128xf32>
    %19 = vector.shape_cast %16 : vector<256x128xf32> to vector<2x128x128xf32>
    %20 = vector.shape_cast %17 : vector<256x128xf32> to vector<2x128x128xf32>
    %cst_15 = arith.constant dense<0.000000e+00> : vector<2x128x128xf32>
    %21 = tpu.matmul %18, %19, %cst_15 {dimension_numbers = #tpu.dot_dimension_numbers<[2], [2], [1], [1], [0, 0, 0, 1, 1, 1], [0], [0]>} : vector<2x128x128xf32>, vector<2x128x128xf32>, vector<2x128x128xf32> -> vector<2x128x128xf32>
    %cst_16 = arith.constant dense<0xFF800000> : vector<2x128xf32>
    %22 = vector.multi_reduction <maximumf>, %21, %cst_16 [2] : vector<2x128x128xf32> to vector<2x128xf32>
    %23 = vector.shape_cast %22 : vector<2x128xf32> to vector<2x128x1xf32>
    %24 = vector.broadcast %23 : vector<2x128x1xf32> to vector<2x128x128xf32>
    %25 = arith.subf %21, %24 : vector<2x128x128xf32>
    %26 = math.exp %25 : vector<2x128x128xf32>
    %cst_17 = arith.constant dense<0.000000e+00> : vector<2x128xf32>
    %27 = vector.multi_reduction <add>, %26, %cst_17 [2] : vector<2x128x128xf32> to vector<2x128xf32>
    %28 = vector.shape_cast %27 : vector<2x128xf32> to vector<2x128x1xf32>
    %29 = tpu.reciprocal %28 {approx = true} : vector<2x128x1xf32> -> vector<2x128x1xf32>
    %30 = vector.broadcast %29 : vector<2x128x1xf32> to vector<2x128x128xf32>
    %31 = arith.mulf %26, %30 : vector<2x128x128xf32>
    %c0_18 = arith.constant 0 : index
    %c0_19 = arith.constant 0 : index
    %c0_20 = arith.constant 0 : index
    %32 = vector.load %arg10[%c0_18, %c0_19, %c0_20] : memref<2x128x128xf32, #tpu.memory_space<vmem>>, vector<2x128x128xf32>
    tpu.vector_store %arg10[%c0_18, %c0_19, %c0_20], %31 {strides = array<i32>} : memref<2x128x128xf32, #tpu.memory_space<vmem>>, vector<2x128x128xf32>,
    %cst_21 = arith.constant dense<0.000000e+00> : vector<2x128x128xf32>
    %33 = tpu.matmul %31, %20, %cst_21 {dimension_numbers = #tpu.dot_dimension_numbers<[2], [1], [1], [2], [0, 0, 0, 1, 1, 2], [0], [0]>} : vector<2x128x128xf32>, vector<2x128x128xf32>, vector<2x128x128xf32> -> vector<2x128x128xf32>
    %34 = vector.shape_cast %33 : vector<2x128x128xf32> to vector<256x128xf32>
    %c0_22 = arith.constant 0 : index
    %c0_23 = arith.constant 0 : index
    %c0_24 = arith.constant 0 : index
    %35 = vector.load %arg7[%c0_22, %c0_23, %c0_24] : memref<3x128x128xf32, #tpu.memory_space<vmem>>, vector<1x128x128xf32>
    %36 = vector.shape_cast %35 : vector<1x128x128xf32> to vector<128x128xf32>
    %cst_25 = arith.constant dense<0.000000e+00> : vector<256x128xf32>
    %37 = tpu.matmul %34, %36, %cst_25 {dimension_numbers = #tpu.dot_dimension_numbers<[1], [0], [0], [1], [0, 0, 1, 1], [], []>} : vector<256x128xf32>, vector<128x128xf32>, vector<256x128xf32> -> vector<256x128xf32>
    %c0_26 = arith.constant 0 : index
    %c0_27 = arith.constant 0 : index
    %c0_28 = arith.constant 0 : index
    %38 = vector.load %arg8[%c0_26, %c0_27, %c0_28] : memref<3x1x128xf32, #tpu.memory_space<vmem>>, vector<1x1x128xf32>
    %39 = vector.shape_cast %38 : vector<1x1x128xf32> to vector<1x128xf32>
    %40 = vector.broadcast %39 : vector<1x128xf32> to vector<256x128xf32>
    %41 = arith.addf %37, %40 : vector<256x128xf32>
    %cst_29 = arith.constant 0.000000e+00 : f32
    %42 = vector.broadcast %cst_29 : f32 to vector<256x128xf32>
    %43 = arith.maximumf %41, %42 : vector<256x128xf32>
    %c1 = arith.constant 1 : index
    %c0_30 = arith.constant 0 : index
    %c0_31 = arith.constant 0 : index
    %44 = vector.load %arg7[%c1, %c0_30, %c0_31] : memref<3x128x128xf32, #tpu.memory_space<vmem>>, vector<1x128x128xf32>
    %45 = vector.shape_cast %44 : vector<1x128x128xf32> to vector<128x128xf32>
    %cst_32 = arith.constant dense<0.000000e+00> : vector<256x128xf32>
    %46 = tpu.matmul %43, %45, %cst_32 {dimension_numbers = #tpu.dot_dimension_numbers<[1], [0], [0], [1], [0, 0, 1, 1], [], []>} : vector<256x128xf32>, vector<128x128xf32>, vector<256x128xf32> -> vector<256x128xf32>
    %c1_33 = arith.constant 1 : index
    %c0_34 = arith.constant 0 : index
    %c0_35 = arith.constant 0 : index
    %47 = vector.load %arg8[%c1_33, %c0_34, %c0_35] : memref<3x1x128xf32, #tpu.memory_space<vmem>>, vector<1x1x128xf32>
    %48 = vector.shape_cast %47 : vector<1x1x128xf32> to vector<1x128xf32>
    %49 = vector.broadcast %48 : vector<1x128xf32> to vector<256x128xf32>
    %50 = arith.addf %46, %49 : vector<256x128xf32>
    %cst_36 = arith.constant 0.000000e+00 : f32
    %51 = vector.broadcast %cst_36 : f32 to vector<256x128xf32>
    %52 = arith.maximumf %50, %51 : vector<256x128xf32>
    %c2 = arith.constant 2 : index
    %c0_37 = arith.constant 0 : index
    %c0_38 = arith.constant 0 : index
    %53 = vector.load %arg7[%c2, %c0_37, %c0_38] : memref<3x128x128xf32, #tpu.memory_space<vmem>>, vector<1x128x128xf32>
    %54 = vector.shape_cast %53 : vector<1x128x128xf32> to vector<128x128xf32>
    %cst_39 = arith.constant dense<0.000000e+00> : vector<256x128xf32>
    %55 = tpu.matmul %52, %54, %cst_39 {dimension_numbers = #tpu.dot_dimension_numbers<[1], [0], [0], [1], [0, 0, 1, 1], [], []>} : vector<256x128xf32>, vector<128x128xf32>, vector<256x128xf32> -> vector<256x128xf32>
    %c2_40 = arith.constant 2 : index
    %c0_41 = arith.constant 0 : index
    %c0_42 = arith.constant 0 : index
    %56 = vector.load %arg8[%c2_40, %c0_41, %c0_42] : memref<3x1x128xf32, #tpu.memory_space<vmem>>, vector<1x1x128xf32>
    %57 = vector.shape_cast %56 : vector<1x1x128xf32> to vector<1x128xf32>
    %58 = vector.broadcast %57 : vector<1x128xf32> to vector<256x128xf32>
    %59 = arith.addf %55, %58 : vector<256x128xf32>
    %cst_43 = arith.constant 0.000000e+00 : f32
    %60 = vector.broadcast %cst_43 : f32 to vector<256x128xf32>
    %61 = arith.maximumf %59, %60 : vector<256x128xf32>
    %62 = vector.shape_cast %61 : vector<256x128xf32> to vector<2x128x128xf32>
    %c0_44 = arith.constant 0 : index
    %c0_45 = arith.constant 0 : index
    %c0_46 = arith.constant 0 : index
    %63 = vector.load %arg9[%c0_44, %c0_45, %c0_46] : memref<2x128x128xf32, #tpu.memory_space<vmem>>, vector<2x128x128xf32>
    tpu.vector_store %arg9[%c0_44, %c0_45, %c0_46], %62 {strides = array<i32>} : memref<2x128x128xf32, #tpu.memory_space<vmem>>, vector<2x128x128xf32>,
    return
  }
  func.func @transform_0(%arg0: i32) -> (i32, i32, i32) {
    %c0_i32 = arith.constant 0 : i32
    %c0_i32_0 = arith.constant 0 : i32
    %c0_i32_1 = arith.constant 0 : i32
    return %arg0, %c0_i32, %c0_i32_0 : i32, i32, i32
  }
  func.func @transform_1(%arg0: i32) -> (i32, i32, i32) {
    %c0_i32 = arith.constant 0 : i32
    %c0_i32_0 = arith.constant 0 : i32
    %c0_i32_1 = arith.constant 0 : i32
    return %arg0, %c0_i32, %c0_i32_0 : i32, i32, i32
  }
  func.func @transform_2(%arg0: i32) -> (i32, i32) {
    %c0_i32 = arith.constant 0 : i32
    %c0_i32_0 = arith.constant 0 : i32
    %c0_i32_1 = arith.constant 0 : i32
    return %c0_i32, %c0_i32_0 : i32, i32
  }
  func.func @transform_3(%arg0: i32) -> (i32, i32) {
    %c0_i32 = arith.constant 0 : i32
    %c0_i32_0 = arith.constant 0 : i32
    %c0_i32_1 = arith.constant 0 : i32
    return %c0_i32, %c0_i32_0 : i32, i32
  }
  func.func @transform_4(%arg0: i32) -> (i32, i32) {
    %c0_i32 = arith.constant 0 : i32
    %c0_i32_0 = arith.constant 0 : i32
    %c0_i32_1 = arith.constant 0 : i32
    return %c0_i32, %c0_i32_0 : i32, i32
  }
  func.func @transform_5(%arg0: i32) -> (i32, i32) {
    %c0_i32 = arith.constant 0 : i32
    %c0_i32_0 = arith.constant 0 : i32
    %c0_i32_1 = arith.constant 0 : i32
    return %c0_i32, %c0_i32_0 : i32, i32
  }
  func.func @transform_6(%arg0: i32) -> (i32, i32, i32) {
    %c0_i32 = arith.constant 0 : i32
    %c0_i32_0 = arith.constant 0 : i32
    %c0_i32_1 = arith.constant 0 : i32
    %c0_i32_2 = arith.constant 0 : i32
    return %c0_i32, %c0_i32_0, %c0_i32_1 : i32, i32, i32
  }
  func.func @transform_7(%arg0: i32) -> (i32, i32, i32) {
    %c0_i32 = arith.constant 0 : i32
    %c0_i32_0 = arith.constant 0 : i32
    %c0_i32_1 = arith.constant 0 : i32
    %c0_i32_2 = arith.constant 0 : i32
    return %c0_i32, %c0_i32_0, %c0_i32_1 : i32, i32, i32
  }
  func.func @transform_8(%arg0: i32) -> (i32, i32, i32) {
    %c0_i32 = arith.constant 0 : i32
    %c0_i32_0 = arith.constant 0 : i32
    %c0_i32_1 = arith.constant 0 : i32
    return %arg0, %c0_i32, %c0_i32_0 : i32, i32, i32
  }
  func.func @transform_9(%arg0: i32) -> (i32, i32, i32) {
    %c0_i32 = arith.constant 0 : i32
    %c0_i32_0 = arith.constant 0 : i32
    %c0_i32_1 = arith.constant 0 : i32
    return %arg0, %c0_i32, %c0_i32_0 : i32, i32, i32
  }
}

</mosaic_0001>

<llo_original>
// kernel: tpu_custom_call.1
$region0: #{tpu_custom_call.1}
  #allocation0 [shape = 'u32[]', space=smem, size = 0x4, offset = 0x4, fixed_abs, tag = 'smem constant byte address 0x4 - core index']
  #allocation1 [shape = 'u32[72,128]{1,0:T(1,128)}', space=vmem, size = 0x9000, scoped, tag = 'internal scratch']
  %s0 = inlined_call_operand.hbm [shape: f32[8,128,128], index: 0, kind: input, shape index: {}]
  %s1 = inlined_call_operand.hbm [shape: f32[8,128,128], index: 1, kind: input, shape index: {}]
  %s2 = inlined_call_operand.hbm [shape: f32[128,128], index: 2, kind: input, shape index: {}]
  %s3 = inlined_call_operand.hbm [shape: f32[1,128], index: 3, kind: input, shape index: {}]
  %s4 = inlined_call_operand.hbm [shape: f32[128,256], index: 4, kind: input, shape index: {}]
  %s5 = inlined_call_operand.vmem [shape: f32[1,256], index: 5, kind: input, shape index: {}]
  %s6 = inlined_call_operand.hbm [shape: f32[3,128,128], index: 6, kind: input, shape index: {}]
  %s7 = inlined_call_operand.vmem [shape: f32[3,1,128], index: 7, kind: input, shape index: {}]
  %s8 = inlined_call_operand.hbm [shape: f32[8,128,128], index: 8, kind: output, shape index: {0}]
  %s9 = inlined_call_operand.hbm [shape: f32[8,128,128], index: 9, kind: output, shape index: {1}]
  %10 = xla_tuple %s8, %s9
  %s11 = sld [smem:[#allocation0]]
  $region97: #{tpu_custom_call.1} parent=0
    _
  %s13 = ssub.s32 1, %s11
  %s14 = scalar_select 0, %s13, %s11
  $region1: #{tpu_custom_call.1} parent=0
    #allocation2 [shape = 'u8[262144]{0}', space=vmem, size = 0x40000, scoped, tag = 'input window, operand 0']
    #allocation3 [shape = 's32[2]{0}', space=sflag, size = 0x8, scoped, tag = 'scoped memory for tpu_custom_call.1']
    #allocation4 [shape = 's32[2]{0}', space=sflag, size = 0x8, scoped, tag = 'scoped memory for tpu_custom_call.1']
    #allocation5 [shape = 'u8[262144]{0}', space=vmem, size = 0x40000, scoped, tag = 'input window, operand 1']
    #allocation6 [shape = 's32[2]{0}', space=sflag, size = 0x8, scoped, tag = 'scoped memory for tpu_custom_call.1']
    #allocation7 [shape = 'u8[65536]{0}', space=vmem, size = 0x10000, scoped, tag = 'input window, operand 2, single buffered']
    #allocation8 [shape = 'u8[512]{0}', space=vmem, size = 0x400, scoped, tag = 'input window, operand 3, single buffered']
    #allocation9 [shape = 's32[1]{0}', space=sflag, size = 0x4, scoped, tag = 'scoped memory for tpu_custom_call.1']
    #allocation10 [shape = 'u8[131072]{0}', space=vmem, size = 0x20000, scoped, tag = 'input window, operand 4, single buffered']
    #allocation11 [shape = 'u8[196608]{0}', space=vmem, size = 0x30000, scoped, tag = 'input window, operand 6, single buffered']
    #allocation12 [shape = 's32[1]{0}', space=sflag, size = 0x4, scoped, tag = 'scoped memory for tpu_custom_call.1']
    #allocation13 [shape = 'u8[262144]{0}', space=vmem, size = 0x40000, scoped, tag = 'output window, operand 0']
    #allocation14 [shape = 'u8[262144]{0}', space=vmem, size = 0x40000, scoped, tag = 'output window, operand 1']
    #allocation15 [shape = 's32[2]{0}', space=sflag, size = 0x8, scoped, tag = 'scoped memory for tpu_custom_call.1']
    %15 = vsyncpa [#allocation3], 0
    %s16 = scalar_lea.sflag [#allocation3], 1
    %17 = vsyncpa %s16, 0
    %18 = vsyncpa [#allocation6], 0
    %s19 = scalar_lea.sflag [#allocation6], 1
    %20 = vsyncpa %s19, 0
    %21 = vsyncpa [#allocation9], 0
    %22 = vsyncpa [#allocation12], 0
    %23 = vsyncpa [#allocation4], 0
    %s24 = scalar_lea.sflag [#allocation4], 1
    %25 = vsyncpa %s24, 0
    %26 = vsyncpa [#allocation15], 0
    %s27 = scalar_lea.sflag [#allocation15], 1
    %28 = vsyncpa %s27, 0
    loop: start=0, step=1, limit=6
    $region2: #{tpu_custom_call.1} parent=1 // loop_pre_header
      _
    $region3: #{tpu_custom_call.1} parent=1 // loop_header
      %s30 = sphi 0, %s34
      %p31 = scmp.ge.s32.totalorder %s30, 6
      %s40 = sphi 0, %s42
      %s43 = sphi 0, %s40
      %s44 = sphi 0, %s43
      %s60 = sphi 0, %s44
      %s66 = sphi 0, %s68
      %s69 = sphi 0, %s66
      %s70 = sphi 0, %s69
      %s86 = sphi 0, %s70
      %s90 = sphi 0, %s90
      %s92 = sphi 0, %s90
      %s93 = sphi 0, %s92
      %s107 = sphi 0, %s93
      %s111 = sphi 0, %s111
      %s113 = sphi 0, %s111
      %s114 = sphi 0, %s113
      %s128 = sphi 0, %s114
      %s132 = sphi 0, %s132
      %s134 = sphi 0, %s132
      %s135 = sphi 0, %s134
      %s149 = sphi 0, %s135
      %s153 = sphi 0, %s153
      %s155 = sphi 0, %s153
      %s156 = sphi 0, %s155
      %s170 = sphi 0, %s156
      %s174 = sphi 0, %s174
      %s176 = sphi 0, %s174
      %s177 = sphi 0, %s176
      %s191 = sphi 0, %s177
      %s195 = sphi 0, %s195
      %s197 = sphi 0, %s195
      %s198 = sphi 0, %s197
      %s212 = sphi 0, %s198
      %s218 = sphi 0, %s220
      %s221 = sphi 0, %s218
      %s222 = sphi 0, %s221
      %s238 = sphi 0, %s222
      %s244 = sphi 0, %s246
      %s247 = sphi 0, %s244
      %s248 = sphi 0, %s247
      %s264 = sphi 0, %s248
    $region4: #{tpu_custom_call.1} parent=1 // loop_header_branch
      %33 = sbr.rel (%p31) target = $region8
    $region5: #{tpu_custom_call.1} parent=1 // loop_body
      %s35 = ssub.s32 %s30, 1
      %s36 = ssub.s32 %s30, 2
      %s37 = sadd.s32 %s30, 1
      %s38 = ssub.s32 %s30, %s37
      %p39 = scmp.eq.s32.totalorder %s38, 0
      %s41 = sadd.s32 %s40, 1
      %s42 = scalar_select %p39, %s40, %s41
      %p45 = pneg %p39
      %p46 = scmp.eq.s32.totalorder %s30, 3
      %p47 = por %p45, %p46
      %p48 = scmp.ne.s32.totalorder %s40, %s43
      %p49 = scmp.eq.s32.totalorder %s30, 0
      %p50 = por %p48, %p49
      %p51 = scmp.ne.s32.totalorder %s40, %s43
      %p52 = scmp.eq.s32.totalorder %s35, 3
      %p53 = por %p51, %p52
      %p54 = scmp.ne.s32.totalorder %s43, %s44
      %p55 = scmp.eq.s32.totalorder %s35, 0
      %p56 = por %p54, %p55
      %p57 = scmp.ne.s32.totalorder %s43, %s44
      %p58 = scmp.eq.s32.totalorder %s36, 3
      %p59 = por %p57, %p58
      %p61 = scmp.ne.s32.totalorder %s44, %s60
      %p62 = scmp.eq.s32.totalorder %s36, 0
      %p63 = por %p61, %p62
      %s64 = ssub.s32 %s30, %s37
      %p65 = scmp.eq.s32.totalorder %s64, 0
      %s67 = sadd.s32 %s66, 1
      %s68 = scalar_select %p65, %s66, %s67
      %p71 = pneg %p65
      %p72 = scmp.eq.s32.totalorder %s30, 3
      %p73 = por %p71, %p72
      %p74 = scmp.ne.s32.totalorder %s66, %s69
      %p75 = scmp.eq.s32.totalorder %s30, 0
      %p76 = por %p74, %p75
      %p77 = scmp.ne.s32.totalorder %s66, %s69
      %p78 = scmp.eq.s32.totalorder %s35, 3
      %p79 = por %p77, %p78
      %p80 = scmp.ne.s32.totalorder %s69, %s70
      %p81 = scmp.eq.s32.totalorder %s35, 0
      %p82 = por %p80, %p81
      %p83 = scmp.ne.s32.totalorder %s69, %s70
      %p84 = scmp.eq.s32.totalorder %s36, 3
      %p85 = por %p83, %p84
      %p87 = scmp.ne.s32.totalorder %s70, %s86
      %p88 = scmp.eq.s32.totalorder %s36, 0
      %p89 = por %p87, %p88
      %s91 = sadd.s32 %s90, 1
      %p94 = scmp.eq.s32.totalorder %s30, 3
      %p95 = scmp.ne.s32.totalorder %s90, %s92
      %p96 = scmp.eq.s32.totalorder %s30, 0
      %p97 = por %p95, %p96
      %p98 = scmp.ne.s32.totalorder %s90, %s92
      %p99 = scmp.eq.s32.totalorder %s35, 3
      %p100 = por %p98, %p99
      %p101 = scmp.ne.s32.totalorder %s92, %s93
      %p102 = scmp.eq.s32.totalorder %s35, 0
      %p103 = por %p101, %p102
      %p104 = scmp.ne.s32.totalorder %s92, %s93
      %p105 = scmp.eq.s32.totalorder %s36, 3
      %p106 = por %p104, %p105
      %p108 = scmp.ne.s32.totalorder %s93, %s107
      %p109 = scmp.eq.s32.totalorder %s36, 0
      %p110 = por %p108, %p109
      %s112 = sadd.s32 %s111, 1
      %p115 = scmp.eq.s32.totalorder %s30, 3
      %p116 = scmp.ne.s32.totalorder %s111, %s113
      %p117 = scmp.eq.s32.totalorder %s30, 0
      %p118 = por %p116, %p117
      %p119 = scmp.ne.s32.totalorder %s111, %s113
      %p120 = scmp.eq.s32.totalorder %s35, 3
      %p121 = por %p119, %p120
      %p122 = scmp.ne.s32.totalorder %s113, %s114
      %p123 = scmp.eq.s32.totalorder %s35, 0
      %p124 = por %p122, %p123
      %p125 = scmp.ne.s32.totalorder %s113, %s114
      %p126 = scmp.eq.s32.totalorder %s36, 3
      %p127 = por %p125, %p126
      %p129 = scmp.ne.s32.totalorder %s114, %s128
      %p130 = scmp.eq.s32.totalorder %s36, 0
      %p131 = por %p129, %p130
      %s133 = sadd.s32 %s132, 1
      %p136 = scmp.eq.s32.totalorder %s30, 3
      %p137 = scmp.ne.s32.totalorder %s132, %s134
      %p138 = scmp.eq.s32.totalorder %s30, 0
      %p139 = por %p137, %p138
      %p140 = scmp.ne.s32.totalorder %s132, %s134
      %p141 = scmp.eq.s32.totalorder %s35, 3
      %p142 = por %p140, %p141
      %p143 = scmp.ne.s32.totalorder %s134, %s135
      %p144 = scmp.eq.s32.totalorder %s35, 0
      %p145 = por %p143, %p144
      %p146 = scmp.ne.s32.totalorder %s134, %s135
      %p147 = scmp.eq.s32.totalorder %s36, 3
      %p148 = por %p146, %p147
      %p150 = scmp.ne.s32.totalorder %s135, %s149
      %p151 = scmp.eq.s32.totalorder %s36, 0
      %p152 = por %p150, %p151
      %s154 = sadd.s32 %s153, 1
      %p157 = scmp.eq.s32.totalorder %s30, 3
      %p158 = scmp.ne.s32.totalorder %s153, %s155
      %p159 = scmp.eq.s32.totalorder %s30, 0
      %p160 = por %p158, %p159
      %p161 = scmp.ne.s32.totalorder %s153, %s155
      %p162 = scmp.eq.s32.totalorder %s35, 3
      %p163 = por %p161, %p162
      %p164 = scmp.ne.s32.totalorder %s155, %s156
      %p165 = scmp.eq.s32.totalorder %s35, 0
      %p166 = por %p164, %p165
      %p167 = scmp.ne.s32.totalorder %s155, %s156
      %p168 = scmp.eq.s32.totalorder %s36, 3
      %p169 = por %p167, %p168
      %p171 = scmp.ne.s32.totalorder %s156, %s170
      %p172 = scmp.eq.s32.totalorder %s36, 0
      %p173 = por %p171, %p172
      %s175 = sadd.s32 %s174, 1
      %p178 = scmp.eq.s32.totalorder %s30, 3
      %p179 = scmp.ne.s32.totalorder %s174, %s176
      %p180 = scmp.eq.s32.totalorder %s30, 0
      %p181 = por %p179, %p180
      %p182 = scmp.ne.s32.totalorder %s174, %s176
      %p183 = scmp.eq.s32.totalorder %s35, 3
      %p184 = por %p182, %p183
      %p185 = scmp.ne.s32.totalorder %s176, %s177
      %p186 = scmp.eq.s32.totalorder %s35, 0
      %p187 = por %p185, %p186
      %p188 = scmp.ne.s32.totalorder %s176, %s177
      %p189 = scmp.eq.s32.totalorder %s36, 3
      %p190 = por %p188, %p189
      %p192 = scmp.ne.s32.totalorder %s177, %s191
      %p193 = scmp.eq.s32.totalorder %s36, 0
      %p194 = por %p192, %p193
      %s196 = sadd.s32 %s195, 1
      %p199 = scmp.eq.s32.totalorder %s30, 3
      %p200 = scmp.ne.s32.totalorder %s195, %s197
      %p201 = scmp.eq.s32.totalorder %s30, 0
      %p202 = por %p200, %p201
      %p203 = scmp.ne.s32.totalorder %s195, %s197
      %p204 = scmp.eq.s32.totalorder %s35, 3
      %p205 = por %p203, %p204
      %p206 = scmp.ne.s32.totalorder %s197, %s198
      %p207 = scmp.eq.s32.totalorder %s35, 0
      %p208 = por %p206, %p207
      %p209 = scmp.ne.s32.totalorder %s197, %s198
      %p210 = scmp.eq.s32.totalorder %s36, 3
      %p211 = por %p209, %p210
      %p213 = scmp.ne.s32.totalorder %s198, %s212
      %p214 = scmp.eq.s32.totalorder %s36, 0
      %p215 = por %p213, %p214
      %s216 = ssub.s32 %s30, %s37
      %p217 = scmp.eq.s32.totalorder %s216, 0
      %s219 = sadd.s32 %s218, 1
      %s220 = scalar_select %p217, %s218, %s219
      %p223 = pneg %p217
      %p224 = scmp.eq.s32.totalorder %s30, 3
      %p225 = por %p223, %p224
      %p226 = scmp.ne.s32.totalorder %s218, %s221
      %p227 = scmp.eq.s32.totalorder %s30, 0
      %p228 = por %p226, %p227
      %p229 = scmp.ne.s32.totalorder %s218, %s221
      %p230 = scmp.eq.s32.totalorder %s35, 3
      %p231 = por %p229, %p230
      %p232 = scmp.ne.s32.totalorder %s221, %s222
      %p233 = scmp.eq.s32.totalorder %s35, 0
      %p234 = por %p232, %p233
      %p235 = scmp.ne.s32.totalorder %s221, %s222
      %p236 = scmp.eq.s32.totalorder %s36, 3
      %p237 = por %p235, %p236
      %p239 = scmp.ne.s32.totalorder %s222, %s238
      %p240 = scmp.eq.s32.totalorder %s36, 0
      %p241 = por %p239, %p240
      %s242 = ssub.s32 %s30, %s37
      %p243 = scmp.eq.s32.totalorder %s242, 0
      %s245 = sadd.s32 %s244, 1
      %s246 = scalar_select %p243, %s244, %s245
      %p249 = pneg %p243
      %p250 = scmp.eq.s32.totalorder %s30, 3
      %p251 = por %p249, %p250
      %p252 = scmp.ne.s32.totalorder %s244, %s247
      %p253 = scmp.eq.s32.totalorder %s30, 0
      %p254 = por %p252, %p253
      %p255 = scmp.ne.s32.totalorder %s244, %s247
      %p256 = scmp.eq.s32.totalorder %s35, 3
      %p257 = por %p255, %p256
      %p258 = scmp.ne.s32.totalorder %s247, %s248
      %p259 = scmp.eq.s32.totalorder %s35, 0
      %p260 = por %p258, %p259
      %p261 = scmp.ne.s32.totalorder %s247, %s248
      %p262 = scmp.eq.s32.totalorder %s36, 3
      %p263 = por %p261, %p262
      %p265 = scmp.ne.s32.totalorder %s248, %s264
      %p266 = scmp.eq.s32.totalorder %s36, 0
      %p267 = por %p265, %p266
      %p268 = scmp.le.s32.totalorder 1, %s30
      %p269 = scmp.lt.s32.totalorder %s30, 5
      %p270 = pnand %p268, %p269
      %p271 = pneg %p270
      // Predicated region
      $region9: #{tpu_custom_call.1} parent=5 // pred_check
        _
      $region10: #{tpu_custom_call.1} parent=5 // pred_check_branch
        %273 = sbr.rel (%p270) target = $region12
      $region11: #{tpu_custom_call.1} parent=5 // pred_region
        %s274 = ssub.s32 %s30, 1
        // Predicated region
        $region13: #{tpu_custom_call.1} parent=11 // pred_check
          %p275 = pneg %p103
        $region14: #{tpu_custom_call.1} parent=11 // pred_check_branch
          %277 = sbr.rel (%p275) target = $region16
        $region15: #{tpu_custom_call.1} parent=11 // pred_region
          %279 = vsyncadd [#allocation6], 0
          %s280 = sshll.u32 %s2, 4
          %s281 = int_to_ptr.hbm [resolvable:$true] %s280
          %s282 = sshll.u32 [#allocation7], 4
          %s283 = int_to_ptr.vmem [resolvable:$true] %s282
          %288 = dma.hbm_to_vmem [thread:$0]  %s281, 2048, %s283, [#allocation6], 128, 128, 8
        $region16: #{tpu_custom_call.1} parent=11 // pred_fallthru
          _
        // Predicated region
        $region17: #{tpu_custom_call.1} parent=11 // pred_check
          %p289 = pneg %p124
        $region18: #{tpu_custom_call.1} parent=11 // pred_check_branch
          %291 = sbr.rel (%p289) target = $region20
        $region19: #{tpu_custom_call.1} parent=11 // pred_region
          %293 = vsyncadd [#allocation9], 0
          %s295 = sshll.u32 %s3, 4
          %s296 = int_to_ptr.hbm [resolvable:$true] %s295
          %s297 = sshll.u32 [#allocation8], 4
          %s298 = int_to_ptr.vmem [resolvable:$true] %s297
          %300 = dma.hbm_to_vmem [thread:$0]  %s296, 16, %s298, [#allocation9]
        $region20: #{tpu_custom_call.1} parent=11 // pred_fallthru
          _
        // Predicated region
        $region21: #{tpu_custom_call.1} parent=11 // pred_check
          %p301 = pneg %p145
        $region22: #{tpu_custom_call.1} parent=11 // pred_check_branch
          %303 = sbr.rel (%p301) target = $region24
        $region23: #{tpu_custom_call.1} parent=11 // pred_region
          %305 = vsyncadd [#allocation9], 0
          %s306 = sshll.u32 %s4, 4
          %s307 = int_to_ptr.hbm [resolvable:$true] %s306
          %s308 = sshll.u32 [#allocation10], 4
          %s309 = int_to_ptr.vmem [resolvable:$true] %s308
          %314 = dma.hbm_to_vmem [thread:$0]  %s307, 4096, %s309, [#allocation9], 256, 256, 16
        $region24: #{tpu_custom_call.1} parent=11 // pred_fallthru
          _
        // Predicated region
        $region25: #{tpu_custom_call.1} parent=11 // pred_check
          %p315 = pneg %p166
        $region26: #{tpu_custom_call.1} parent=11 // pred_check_branch
          %317 = sbr.rel (%p315) target = $region28
        $region27: #{tpu_custom_call.1} parent=11 // pred_region
          _
        $region28: #{tpu_custom_call.1} parent=11 // pred_fallthru
          _
        // Predicated region
        $region29: #{tpu_custom_call.1} parent=11 // pred_check
          %p318 = pneg %p187
        $region30: #{tpu_custom_call.1} parent=11 // pred_check_branch
          %320 = sbr.rel (%p318) target = $region32
        $region31: #{tpu_custom_call.1} parent=11 // pred_region
          %322 = vsyncadd [#allocation12], 0
          %s323 = sshll.u32 %s6, 4
          %s324 = int_to_ptr.hbm [resolvable:$true] %s323
          %s325 = sshll.u32 [#allocation11], 4
          %s326 = int_to_ptr.vmem [resolvable:$true] %s325
          %331 = dma.hbm_to_vmem [thread:$0]  %s324, 6144, %s326, [#allocation12], 128, 128, 8
        $region32: #{tpu_custom_call.1} parent=11 // pred_fallthru
          _
        // Predicated region
        $region33: #{tpu_custom_call.1} parent=11 // pred_check
          %p332 = pneg %p208
        $region34: #{tpu_custom_call.1} parent=11 // pred_check_branch
          %334 = sbr.rel (%p332) target = $region36
        $region35: #{tpu_custom_call.1} parent=11 // pred_region
          _
        $region36: #{tpu_custom_call.1} parent=11 // pred_fallthru
          _
      $region12: #{tpu_custom_call.1} parent=5 // pred_fallthru
        _
      %p335 = scmp.lt.s32.totalorder %s30, 4
      // Predicated region
      $region37: #{tpu_custom_call.1} parent=5 // pred_check
        %p336 = pneg %p335
      $region38: #{tpu_custom_call.1} parent=5 // pred_check_branch
        %338 = sbr.rel (%p336) target = $region40
      $region39: #{tpu_custom_call.1} parent=5 // pred_region
        // Predicated region
        $region41: #{tpu_custom_call.1} parent=39 // pred_check
          %p339 = pneg %p50
        $region42: #{tpu_custom_call.1} parent=39 // pred_check_branch
          %341 = sbr.rel (%p339) target = $region44
        $region43: #{tpu_custom_call.1} parent=39 // pred_region
          %s342 = sand.u32 %s40, 1
          %s343 = scalar_lea.sflag [#allocation3], %s342
          %s344 = sand.u32 %s40, 1
          %s345 = smul.addr %s344, 256
          %s346 = scalar_lea.vmem [#allocation2], %s345
          %s347 = smul.u32 2, %s30
          %349 = vsyncadd %s343, 0
          %s350 = smul.addr %s347, 16
          %s351 = smul.addr %s350, 8
          %s352 = scalar_lea.hbm %s0, %s351
          %s353 = sshll.u32 %s352, 4
          %s354 = int_to_ptr.hbm [resolvable:$true] %s353
          %s355 = sshll.u32 %s346, 4
          %s356 = int_to_ptr.vmem [resolvable:$true] %s355
          %361 = dma.hbm_to_vmem [thread:$0]  %s354, 4096, %s356, %s343, 128, 128, 8
        $region44: #{tpu_custom_call.1} parent=39 // pred_fallthru
          _
        // Predicated region
        $region45: #{tpu_custom_call.1} parent=39 // pred_check
          %p362 = pneg %p76
        $region46: #{tpu_custom_call.1} parent=39 // pred_check_branch
          %364 = sbr.rel (%p362) target = $region48
        $region47: #{tpu_custom_call.1} parent=39 // pred_region
          %s365 = sand.u32 %s30, 1
          %s366 = scalar_lea.sflag [#allocation6], %s365
          %s367 = sand.u32 %s66, 1
          %s368 = smul.addr %s367, 256
          %s369 = scalar_lea.vmem [#allocation5], %s368
          %s370 = smul.u32 2, %s30
          %372 = vsyncadd %s366, 0
          %s373 = smul.addr %s370, 16
          %s374 = smul.addr %s373, 8
          %s375 = scalar_lea.hbm %s1, %s374
          %s376 = sshll.u32 %s375, 4
          %s377 = int_to_ptr.hbm [resolvable:$true] %s376
          %s378 = sshll.u32 %s369, 4
          %s379 = int_to_ptr.vmem [resolvable:$true] %s378
          %384 = dma.hbm_to_vmem [thread:$0]  %s377, 4096, %s379, %s366, 128, 128, 8
        $region48: #{tpu_custom_call.1} parent=39 // pred_fallthru
          _
      $region40: #{tpu_custom_call.1} parent=5 // pred_fallthru
        _
      %p385 = scmp.le.s32.totalorder 1, %s30
      %p386 = scmp.lt.s32.totalorder %s30, 5
      %p387 = pnand %p385, %p386
      %p388 = pneg %p387
      // Predicated region
      $region49: #{tpu_custom_call.1} parent=5 // pred_check
        _
      $region50: #{tpu_custom_call.1} parent=5 // pred_check_branch
        %390 = sbr.rel (%p387) target = $region52
      $region51: #{tpu_custom_call.1} parent=5 // pred_region
        %s391 = ssub.s32 %s30, 1
        %s392 = sand.u32 %s43, 1
        %s393 = scalar_lea.sflag [#allocation3], %s392
        %s394 = sand.u32 %s43, 1
        %s395 = smul.addr %s394, 256
        %s396 = scalar_lea.vmem [#allocation2], %s395
        // Predicated region
        $region53: #{tpu_custom_call.1} parent=51 // pred_check
          %p397 = pneg %p56
        $region54: #{tpu_custom_call.1} parent=51 // pred_check_branch
          %399 = sbr.rel (%p397) target = $region56
        $region55: #{tpu_custom_call.1} parent=51 // pred_region
          %401 = dma.done %s393, 4096
        $region56: #{tpu_custom_call.1} parent=51 // pred_fallthru
          _
        %s402 = sand.u32 %s35, 1
        %s403 = scalar_lea.sflag [#allocation6], %s402
        %s404 = sand.u32 %s69, 1
        %s405 = smul.addr %s404, 256
        %s406 = scalar_lea.vmem [#allocation5], %s405
        // Predicated region
        $region57: #{tpu_custom_call.1} parent=51 // pred_check
          %p407 = pneg %p82
        $region58: #{tpu_custom_call.1} parent=51 // pred_check_branch
          %409 = sbr.rel (%p407) target = $region60
        $region59: #{tpu_custom_call.1} parent=51 // pred_region
          %411 = dma.done %s403, 4096
        $region60: #{tpu_custom_call.1} parent=51 // pred_fallthru
          _
        // Predicated region
        $region61: #{tpu_custom_call.1} parent=51 // pred_check
          %p412 = pneg %p103
        $region62: #{tpu_custom_call.1} parent=51 // pred_check_branch
          %414 = sbr.rel (%p412) target = $region64
        $region63: #{tpu_custom_call.1} parent=51 // pred_region
          %416 = dma.done [#allocation6], 2048
        $region64: #{tpu_custom_call.1} parent=51 // pred_fallthru
          _
        // Predicated region
        $region65: #{tpu_custom_call.1} parent=51 // pred_check
          %p417 = pneg %p124
        $region66: #{tpu_custom_call.1} parent=51 // pred_check_branch
          %419 = sbr.rel (%p417) target = $region68
        $region67: #{tpu_custom_call.1} parent=51 // pred_region
          %421 = dma.done [#allocation9], 16
        $region68: #{tpu_custom_call.1} parent=51 // pred_fallthru
          _
        // Predicated region
        $region69: #{tpu_custom_call.1} parent=51 // pred_check
          %p422 = pneg %p145
        $region70: #{tpu_custom_call.1} parent=51 // pred_check_branch
          %424 = sbr.rel (%p422) target = $region72
        $region71: #{tpu_custom_call.1} parent=51 // pred_region
          %426 = dma.done [#allocation9], 4096
        $region72: #{tpu_custom_call.1} parent=51 // pred_fallthru
          _
        // Predicated region
        $region73: #{tpu_custom_call.1} parent=51 // pred_check
          %p427 = pneg %p187
        $region74: #{tpu_custom_call.1} parent=51 // pred_check_branch
          %429 = sbr.rel (%p427) target = $region76
        $region75: #{tpu_custom_call.1} parent=51 // pred_region
          %431 = dma.done [#allocation12], 6144
        $region76: #{tpu_custom_call.1} parent=51 // pred_fallthru
          _
        %s432 = sand.u32 %s43, 1
        %s433 = scalar_lea.sflag [#allocation3], %s432
        %s434 = sand.u32 %s43, 1
        %s435 = smul.addr %s434, 256
        %s436 = scalar_lea.vmem [#allocation2], %s435
        %p437 = pneg %p56
        %p438 = pneg %p53
        %s439 = sand.u32 %s35, 1
        %s440 = scalar_lea.sflag [#allocation6], %s439
        %s441 = sand.u32 %s69, 1
        %s442 = smul.addr %s441, 256
        %s443 = scalar_lea.vmem [#allocation5], %s442
        %p444 = pneg %p82
        %p445 = pneg %p79
        %p446 = pneg %p103
        %p447 = pneg %p100
        %p448 = pneg %p124
        %p449 = pneg %p121
        %p450 = pneg %p145
        %p451 = pneg %p142
        %p452 = pneg %p166
        %p453 = pneg %p163
        %p454 = pneg %p187
        %p455 = pneg %p184
        %p456 = pneg %p208
        %p457 = pneg %p205
        %p458 = pneg %p234
        %p459 = pneg %p231
        %s460 = sand.u32 %s221, 1
        %s461 = scalar_lea.sflag [#allocation4], %s460
        %s462 = sand.u32 %s221, 1
        %s463 = smul.addr %s462, 256
        %s464 = scalar_lea.vmem [#allocation13], %s463
        %p465 = pneg %p260
        %p466 = pneg %p257
        %s467 = sand.u32 %s247, 1
        %s468 = scalar_lea.sflag [#allocation15], %s467
        %s469 = sand.u32 %s247, 1
        %s470 = smul.addr %s469, 256
        %s471 = scalar_lea.vmem [#allocation14], %s470
        %s472 = smul.u32 2, %s35
        %s473 = smul.u32 2, %s35
        %s474 = smul.u32 2, %s35
        %s475 = smul.u32 2, %s35
        %v476 = vld [vmem:[%s396] sm:$0xff]
        %v477 = vld [vmem:[%s396 + $0x8] sm:$0xff]
        %v478 = vld [vmem:[%s396 + $0x10] sm:$0xff]
        %v479 = vld [vmem:[%s396 + $0x18] sm:$0xff]
        %v480 = vld [vmem:[%s396 + $0x20] sm:$0xff]
        %v481 = vld [vmem:[%s396 + $0x28] sm:$0xff]
        %v482 = vld [vmem:[%s396 + $0x30] sm:$0xff]
        %v483 = vld [vmem:[%s396 + $0x38] sm:$0xff]
        %v484 = vld [vmem:[%s396 + $0x40] sm:$0xff]
        %v485 = vld [vmem:[%s396 + $0x48] sm:$0xff]
        %v486 = vld [vmem:[%s396 + $0x50] sm:$0xff]
        %v487 = vld [vmem:[%s396 + $0x58] sm:$0xff]
        %v488 = vld [vmem:[%s396 + $0x60] sm:$0xff]
        %v489 = vld [vmem:[%s396 + $0x68] sm:$0xff]
        %v490 = vld [vmem:[%s396 + $0x70] sm:$0xff]
        %v491 = vld [vmem:[%s396 + $0x78] sm:$0xff]
        %v492 = vld [vmem:[%s396 + $0x80] sm:$0xff]
        %v493 = vld [vmem:[%s396 + $0x88] sm:$0xff]
        %v494 = vld [vmem:[%s396 + $0x90] sm:$0xff]
        %v495 = vld [vmem:[%s396 + $0x98] sm:$0xff]
        %v496 = vld [vmem:[%s396 + $0xa0] sm:$0xff]
        %v497 = vld [vmem:[%s396 + $0xa8] sm:$0xff]
        %v498 = vld [vmem:[%s396 + $0xb0] sm:$0xff]
        %v499 = vld [vmem:[%s396 + $0xb8] sm:$0xff]
        %v500 = vld [vmem:[%s396 + $0xc0] sm:$0xff]
        %v501 = vld [vmem:[%s396 + $0xc8] sm:$0xff]
        %v502 = vld [vmem:[%s396 + $0xd0] sm:$0xff]
        %v503 = vld [vmem:[%s396 + $0xd8] sm:$0xff]
        %v504 = vld [vmem:[%s396 + $0xe0] sm:$0xff]
        %v505 = vld [vmem:[%s396 + $0xe8] sm:$0xff]
        %v506 = vld [vmem:[%s396 + $0xf0] sm:$0xff]
        %v507 = vld [vmem:[%s396 + $0xf8] sm:$0xff]
        %v508 = vld [vmem:[%s406] sm:$0xff]
        %v509 = vld [vmem:[%s406 + $0x8] sm:$0xff]
        %v510 = vld [vmem:[%s406 + $0x10] sm:$0xff]
        %v511 = vld [vmem:[%s406 + $0x18] sm:$0xff]
        %v512 = vld [vmem:[%s406 + $0x20] sm:$0xff]
        %v513 = vld [vmem:[%s406 + $0x28] sm:$0xff]
        %v514 = vld [vmem:[%s406 + $0x30] sm:$0xff]
        %v515 = vld [vmem:[%s406 + $0x38] sm:$0xff]
        %v516 = vld [vmem:[%s406 + $0x40] sm:$0xff]
        %v517 = vld [vmem:[%s406 + $0x48] sm:$0xff]
        %v518 = vld [vmem:[%s406 + $0x50] sm:$0xff]
        %v519 = vld [vmem:[%s406 + $0x58] sm:$0xff]
        %v520 = vld [vmem:[%s406 + $0x60] sm:$0xff]
        %v521 = vld [vmem:[%s406 + $0x68] sm:$0xff]
        %v522 = vld [vmem:[%s406 + $0x70] sm:$0xff]
        %v523 = vld [vmem:[%s406 + $0x78] sm:$0xff]
        %v524 = vld [vmem:[%s406 + $0x80] sm:$0xff]
        %v525 = vld [vmem:[%s406 + $0x88] sm:$0xff]
        %v526 = vld [vmem:[%s406 + $0x90] sm:$0xff]
        %v527 = vld [vmem:[%s406 + $0x98] sm:$0xff]
        %v528 = vld [vmem:[%s406 + $0xa0] sm:$0xff]
        %v529 = vld [vmem:[%s406 + $0xa8] sm:$0xff]
        %v530 = vld [vmem:[%s406 + $0xb0] sm:$0xff]
        %v531 = vld [vmem:[%s406 + $0xb8] sm:$0xff]
        %v532 = vld [vmem:[%s406 + $0xc0] sm:$0xff]
        %v533 = vld [vmem:[%s406 + $0xc8] sm:$0xff]
        %v534 = vld [vmem:[%s406 + $0xd0] sm:$0xff]
        %v535 = vld [vmem:[%s406 + $0xd8] sm:$0xff]
        %v536 = vld [vmem:[%s406 + $0xe0] sm:$0xff]
        %v537 = vld [vmem:[%s406 + $0xe8] sm:$0xff]
        %v538 = vld [vmem:[%s406 + $0xf0] sm:$0xff]
        %v539 = vld [vmem:[%s406 + $0xf8] sm:$0xff]
        %v540 = vld [vmem:[#allocation7] sm:$0xff]
        %v541 = vld [vmem:[#allocation7 + $0x8] sm:$0xff]
        %v542 = vld [vmem:[#allocation7 + $0x10] sm:$0xff]
        %v543 = vld [vmem:[#allocation7 + $0x18] sm:$0xff]
        %v544 = vld [vmem:[#allocation7 + $0x20] sm:$0xff]
        %v545 = vld [vmem:[#allocation7 + $0x28] sm:$0xff]
        %v546 = vld [vmem:[#allocation7 + $0x30] sm:$0xff]
        %v547 = vld [vmem:[#allocation7 + $0x38] sm:$0xff]
        %v548 = vld [vmem:[#allocation7 + $0x40] sm:$0xff]
        %v549 = vld [vmem:[#allocation7 + $0x48] sm:$0xff]
        %v550 = vld [vmem:[#allocation7 + $0x50] sm:$0xff]
        %v551 = vld [vmem:[#allocation7 + $0x58] sm:$0xff]
        %v552 = vld [vmem:[#allocation7 + $0x60] sm:$0xff]
        %v553 = vld [vmem:[#allocation7 + $0x68] sm:$0xff]
        %v554 = vld [vmem:[#allocation7 + $0x70] sm:$0xff]
        %v555 = vld [vmem:[#allocation7 + $0x78] sm:$0xff]
        %v556 = vld [vmem:[#allocation8] sm:$0x1]
        %v558 = vperm.slane %v556, 0
        %560 = vmatpush.msra.mxu0 %v555
        %561 = vmatpush.msra.mxu0 %v554
        %562 = vmatpush.msra.mxu0 %v553
        %563 = vmatpush.msra.mxu0 %v552
        %564 = vmatpush.msra.mxu0 %v551
        %565 = vmatpush.msra.mxu0 %v550
        %566 = vmatpush.msra.mxu0 %v549
        %567 = vmatpush.msra.mxu0 %v548
        %568 = vmatpush.msra.mxu0 %v547
        %569 = vmatpush.msra.mxu0 %v546
        %570 = vmatpush.msra.mxu0 %v545
        %571 = vmatpush.msra.mxu0 %v544
        %572 = vmatpush.msra.mxu0 %v543
        %573 = vmatpush.msra.mxu0 %v542
        %574 = vmatpush.msra.mxu0 %v541
        %575 = vmatpush.msra.mxu0 %v540
        %576 = vmatmul.f32.gmra.mxu0 %v508
        %v577 = vpop.f32.mrf.mxu0
        %v578 = vadd.f32 %v558, %v577
        %579 = vmatmul.f32.gmra.mxu0 %v509
        %v580 = vpop.f32.mrf.mxu0
        %v581 = vadd.f32 %v558, %v580
        %582 = vmatmul.f32.gmra.mxu0 %v510
        %v583 = vpop.f32.mrf.mxu0
        %v584 = vadd.f32 %v558, %v583
        %585 = vmatmul.f32.gmra.mxu0 %v511
        %v586 = vpop.f32.mrf.mxu0
        %v587 = vadd.f32 %v558, %v586
        %588 = vmatmul.f32.gmra.mxu0 %v512
        %v589 = vpop.f32.mrf.mxu0
        %v590 = vadd.f32 %v558, %v589
        %591 = vmatmul.f32.gmra.mxu0 %v513
        %v592 = vpop.f32.mrf.mxu0
        %v593 = vadd.f32 %v558, %v592
        %594 = vmatmul.f32.gmra.mxu0 %v514
        %v595 = vpop.f32.mrf.mxu0
        %v596 = vadd.f32 %v558, %v595
        %597 = vmatmul.f32.gmra.mxu0 %v515
        %v598 = vpop.f32.mrf.mxu0
        %v599 = vadd.f32 %v558, %v598
        %600 = vmatmul.f32.gmra.mxu0 %v516
        %v601 = vpop.f32.mrf.mxu0
        %v602 = vadd.f32 %v558, %v601
        %603 = vmatmul.f32.gmra.mxu0 %v517
        %v604 = vpop.f32.mrf.mxu0
        %v605 = vadd.f32 %v558, %v604
        %606 = vmatmul.f32.gmra.mxu0 %v518
        %v607 = vpop.f32.mrf.mxu0
        %v608 = vadd.f32 %v558, %v607
        %609 = vmatmul.f32.gmra.mxu0 %v519
        %v610 = vpop.f32.mrf.mxu0
        %v611 = vadd.f32 %v558, %v610
        %612 = vmatmul.f32.gmra.mxu0 %v520
        %v613 = vpop.f32.mrf.mxu0
        %v614 = vadd.f32 %v558, %v613
        %615 = vmatmul.f32.gmra.mxu0 %v521
        %v616 = vpop.f32.mrf.mxu0
        %v617 = vadd.f32 %v558, %v616
        %618 = vmatmul.f32.gmra.mxu0 %v522
        %v619 = vpop.f32.mrf.mxu0
        %v620 = vadd.f32 %v558, %v619
        %621 = vmatmul.f32.gmra.mxu0 %v523
        %v622 = vpop.f32.mrf.mxu0
        %v623 = vadd.f32 %v558, %v622
        %624 = vmatmul.f32.gmra.mxu0 %v524
        %v625 = vpop.f32.mrf.mxu0
        %v626 = vadd.f32 %v558, %v625
        %627 = vmatmul.f32.gmra.mxu0 %v525
        %v628 = vpop.f32.mrf.mxu0
        %v629 = vadd.f32 %v558, %v628
        %630 = vmatmul.f32.gmra.mxu0 %v526
        %v631 = vpop.f32.mrf.mxu0
        %v632 = vadd.f32 %v558, %v631
        %633 = vmatmul.f32.gmra.mxu0 %v527
        %v634 = vpop.f32.mrf.mxu0
        %v635 = vadd.f32 %v558, %v634
        %636 = vmatmul.f32.gmra.mxu0 %v528
        %v637 = vpop.f32.mrf.mxu0
        %v638 = vadd.f32 %v558, %v637
        %639 = vmatmul.f32.gmra.mxu0 %v529
        %v640 = vpop.f32.mrf.mxu0
        %v641 = vadd.f32 %v558, %v640
        %642 = vmatmul.f32.gmra.mxu0 %v530
        %v643 = vpop.f32.mrf.mxu0
        %v644 = vadd.f32 %v558, %v643
        %645 = vmatmul.f32.gmra.mxu0 %v531
        %v646 = vpop.f32.mrf.mxu0
        %v647 = vadd.f32 %v558, %v646
        %648 = vmatmul.f32.gmra.mxu0 %v532
        %v649 = vpop.f32.mrf.mxu0
        %v650 = vadd.f32 %v558, %v649
        %651 = vmatmul.f32.gmra.mxu0 %v533
        %v652 = vpop.f32.mrf.mxu0
        %v653 = vadd.f32 %v558, %v652
        %654 = vmatmul.f32.gmra.mxu0 %v534
        %v655 = vpop.f32.mrf.mxu0
        %v656 = vadd.f32 %v558, %v655
        %657 = vmatmul.f32.gmra.mxu0 %v535
        %v658 = vpop.f32.mrf.mxu0
        %v659 = vadd.f32 %v558, %v658
        %660 = vmatmul.f32.gmra.mxu0 %v536
        %v661 = vpop.f32.mrf.mxu0
        %v662 = vadd.f32 %v558, %v661
        %663 = vmatmul.f32.gmra.mxu0 %v537
        %v664 = vpop.f32.mrf.mxu0
        %v665 = vadd.f32 %v558, %v664
        %666 = vmatmul.f32.gmra.mxu0 %v538
        %v667 = vpop.f32.mrf.mxu0
        %v668 = vadd.f32 %v558, %v667
        %669 = vmatmul.f32.gmra.mxu0 %v539
        %v670 = vpop.f32.mrf.mxu0
        %v671 = vadd.f32 %v558, %v670
        %672 = vdwg.mxu0
        %v673 = vmul.f32 %v578, 0.088388346
        %v674 = vmul.f32 %v581, 0.088388346
        %v675 = vmul.f32 %v584, 0.088388346
        %v676 = vmul.f32 %v587, 0.088388346
        %v677 = vmul.f32 %v590, 0.088388346
        %v678 = vmul.f32 %v593, 0.088388346
        %v679 = vmul.f32 %v596, 0.088388346
        %v680 = vmul.f32 %v599, 0.088388346
        %v681 = vmul.f32 %v602, 0.088388346
        %v682 = vmul.f32 %v605, 0.088388346
        %v683 = vmul.f32 %v608, 0.088388346
        %v684 = vmul.f32 %v611, 0.088388346
        %v685 = vmul.f32 %v614, 0.088388346
        %v686 = vmul.f32 %v617, 0.088388346
        %v687 = vmul.f32 %v620, 0.088388346
        %v688 = vmul.f32 %v623, 0.088388346
        %v689 = vmul.f32 %v626, 0.088388346
        %v690 = vmul.f32 %v629, 0.088388346
        %v691 = vmul.f32 %v632, 0.088388346
        %v692 = vmul.f32 %v635, 0.088388346
        %v693 = vmul.f32 %v638, 0.088388346
        %v694 = vmul.f32 %v641, 0.088388346
        %v695 = vmul.f32 %v644, 0.088388346
        %v696 = vmul.f32 %v647, 0.088388346
        %v697 = vmul.f32 %v650, 0.088388346
        %v698 = vmul.f32 %v653, 0.088388346
        %v699 = vmul.f32 %v656, 0.088388346
        %v700 = vmul.f32 %v659, 0.088388346
        %v701 = vmul.f32 %v662, 0.088388346
        %v702 = vmul.f32 %v665, 0.088388346
        %v703 = vmul.f32 %v668, 0.088388346
        %v704 = vmul.f32 %v671, 0.088388346
        %v705 = vld [vmem:[#allocation10] sm:$0xff]
        %v706 = vld [vmem:[#allocation10 + $0x8] sm:$0xff]
        %v707 = vld [vmem:[#allocation10 + $0x10] sm:$0xff]
        %v708 = vld [vmem:[#allocation10 + $0x18] sm:$0xff]
        %v709 = vld [vmem:[#allocation10 + $0x20] sm:$0xff]
        %v710 = vld [vmem:[#allocation10 + $0x28] sm:$0xff]
        %v711 = vld [vmem:[#allocation10 + $0x30] sm:$0xff]
        %v712 = vld [vmem:[#allocation10 + $0x38] sm:$0xff]
        %v713 = vld [vmem:[#allocation10 + $0x40] sm:$0xff]
        %v714 = vld [vmem:[#allocation10 + $0x48] sm:$0xff]
        %v715 = vld [vmem:[#allocation10 + $0x50] sm:$0xff]
        %v716 = vld [vmem:[#allocation10 + $0x58] sm:$0xff]
        %v717 = vld [vmem:[#allocation10 + $0x60] sm:$0xff]
        %v718 = vld [vmem:[#allocation10 + $0x68] sm:$0xff]
        %v719 = vld [vmem:[#allocation10 + $0x70] sm:$0xff]
        %v720 = vld [vmem:[#allocation10 + $0x78] sm:$0xff]
        %v721 = vld [vmem:[#allocation10 + $0x80] sm:$0xff]
        %v722 = vld [vmem:[#allocation10 + $0x88] sm:$0xff]
        %v723 = vld [vmem:[#allocation10 + $0x90] sm:$0xff]
        %v724 = vld [vmem:[#allocation10 + $0x98] sm:$0xff]
        %v725 = vld [vmem:[#allocation10 + $0xa0] sm:$0xff]
        %v726 = vld [vmem:[#allocation10 + $0xa8] sm:$0xff]
        %v727 = vld [vmem:[#allocation10 + $0xb0] sm:$0xff]
        %v728 = vld [vmem:[#allocation10 + $0xb8] sm:$0xff]
        %v729 = vld [vmem:[#allocation10 + $0xc0] sm:$0xff]
        %v730 = vld [vmem:[#allocation10 + $0xc8] sm:$0xff]
        %v731 = vld [vmem:[#allocation10 + $0xd0] sm:$0xff]
        %v732 = vld [vmem:[#allocation10 + $0xd8] sm:$0xff]
        %v733 = vld [vmem:[#allocation10 + $0xe0] sm:$0xff]
        %v734 = vld [vmem:[#allocation10 + $0xe8] sm:$0xff]
        %v735 = vld [vmem:[#allocation10 + $0xf0] sm:$0xff]
        %v736 = vld [vmem:[#allocation10 + $0xf8] sm:$0xff]
        %v737 = vld [vmem:[%s5] sm:$0x3]
        %v739 = vperm.slane %v737, 0
        %v740 = vperm.slane %v737, 1
        %743 = vmatpush.msra.mxu0 %v735
        %744 = vmatpush.msra.mxu0 %v733
        %745 = vmatpush.msra.mxu0 %v731
        %746 = vmatpush.msra.mxu0 %v729
        %747 = vmatpush.msra.mxu0 %v727
        %748 = vmatpush.msra.mxu0 %v725
        %749 = vmatpush.msra.mxu0 %v723
        %750 = vmatpush.msra.mxu0 %v721
        %751 = vmatpush.msra.mxu0 %v719
        %752 = vmatpush.msra.mxu0 %v717
        %753 = vmatpush.msra.mxu0 %v715
        %754 = vmatpush.msra.mxu0 %v713
        %755 = vmatpush.msra.mxu0 %v711
        %756 = vmatpush.msra.mxu0 %v709
        %757 = vmatpush.msra.mxu0 %v707
        %758 = vmatpush.msra.mxu0 %v705
        %759 = vmatmul.f32.gmra.mxu0 %v476
        %v760 = vpop.f32.mrf.mxu0
        %v761 = vadd.f32 %v739, %v760
        %762 = vmatmul.f32.gmra.mxu0 %v477
        %v763 = vpop.f32.mrf.mxu0
        %v764 = vadd.f32 %v739, %v763
        %765 = vmatmul.f32.gmra.mxu0 %v478
        %v766 = vpop.f32.mrf.mxu0
        %v767 = vadd.f32 %v739, %v766
        %768 = vmatmul.f32.gmra.mxu0 %v479
        %v769 = vpop.f32.mrf.mxu0
        %v770 = vadd.f32 %v739, %v769
        %771 = vmatmul.f32.gmra.mxu0 %v480
        %v772 = vpop.f32.mrf.mxu0
        %v773 = vadd.f32 %v739, %v772
        %774 = vmatmul.f32.gmra.mxu0 %v481
        %v775 = vpop.f32.mrf.mxu0
        %v776 = vadd.f32 %v739, %v775
        %777 = vmatmul.f32.gmra.mxu0 %v482
        %v778 = vpop.f32.mrf.mxu0
        %v779 = vadd.f32 %v739, %v778
        %780 = vmatmul.f32.gmra.mxu0 %v483
        %v781 = vpop.f32.mrf.mxu0
        %v782 = vadd.f32 %v739, %v781
        %783 = vmatmul.f32.gmra.mxu0 %v484
        %v784 = vpop.f32.mrf.mxu0
        %v785 = vadd.f32 %v739, %v784
        %786 = vmatmul.f32.gmra.mxu0 %v485
        %v787 = vpop.f32.mrf.mxu0
        %v788 = vadd.f32 %v739, %v787
        %789 = vmatmul.f32.gmra.mxu0 %v486
        %v790 = vpop.f32.mrf.mxu0
        %v791 = vadd.f32 %v739, %v790
        %792 = vmatmul.f32.gmra.mxu0 %v487
        %v793 = vpop.f32.mrf.mxu0
        %v794 = vadd.f32 %v739, %v793
        %795 = vmatmul.f32.gmra.mxu0 %v488
        %v796 = vpop.f32.mrf.mxu0
        %v797 = vadd.f32 %v739, %v796
        %798 = vmatmul.f32.gmra.mxu0 %v489
        %v799 = vpop.f32.mrf.mxu0
        %v800 = vadd.f32 %v739, %v799
        %801 = vmatmul.f32.gmra.mxu0 %v490
        %v802 = vpop.f32.mrf.mxu0
        %v803 = vadd.f32 %v739, %v802
        %804 = vmatmul.f32.gmra.mxu0 %v491
        %v805 = vpop.f32.mrf.mxu0
        %v806 = vadd.f32 %v739, %v805
        %807 = vmatmul.f32.gmra.mxu0 %v492
        %v808 = vpop.f32.mrf.mxu0
        %v809 = vadd.f32 %v739, %v808
        %810 = vmatmul.f32.gmra.mxu0 %v493
        %v811 = vpop.f32.mrf.mxu0
        %v812 = vadd.f32 %v739, %v811
        %813 = vmatmul.f32.gmra.mxu0 %v494
        %v814 = vpop.f32.mrf.mxu0
        %v815 = vadd.f32 %v739, %v814
        %816 = vmatmul.f32.gmra.mxu0 %v495
        %v817 = vpop.f32.mrf.mxu0
        %v818 = vadd.f32 %v739, %v817
        %819 = vmatmul.f32.gmra.mxu0 %v496
        %v820 = vpop.f32.mrf.mxu0
        %v821 = vadd.f32 %v739, %v820
        %822 = vmatmul.f32.gmra.mxu0 %v497
        %v823 = vpop.f32.mrf.mxu0
        %v824 = vadd.f32 %v739, %v823
        %825 = vmatmul.f32.gmra.mxu0 %v498
        %v826 = vpop.f32.mrf.mxu0
        %v827 = vadd.f32 %v739, %v826
        %828 = vmatmul.f32.gmra.mxu0 %v499
        %v829 = vpop.f32.mrf.mxu0
        %v830 = vadd.f32 %v739, %v829
        %831 = vmatmul.f32.gmra.mxu0 %v500
        %v832 = vpop.f32.mrf.mxu0
        %v833 = vadd.f32 %v739, %v832
        %834 = vmatmul.f32.gmra.mxu0 %v501
        %v835 = vpop.f32.mrf.mxu0
        %v836 = vadd.f32 %v739, %v835
        %837 = vmatmul.f32.gmra.mxu0 %v502
        %v838 = vpop.f32.mrf.mxu0
        %v839 = vadd.f32 %v739, %v838
        %840 = vmatmul.f32.gmra.mxu0 %v503
        %v841 = vpop.f32.mrf.mxu0
        %v842 = vadd.f32 %v739, %v841
        %843 = vmatmul.f32.gmra.mxu0 %v504
        %v844 = vpop.f32.mrf.mxu0
        %v845 = vadd.f32 %v739, %v844
        %846 = vmatmul.f32.gmra.mxu0 %v505
        %v847 = vpop.f32.mrf.mxu0
        %v848 = vadd.f32 %v739, %v847
        %849 = vmatmul.f32.gmra.mxu0 %v506
        %v850 = vpop.f32.mrf.mxu0
        %v851 = vadd.f32 %v739, %v850
        %852 = vmatmul.f32.gmra.mxu0 %v507
        %v853 = vpop.f32.mrf.mxu0
        %v854 = vadd.f32 %v739, %v853
        %855 = vdwg.mxu0
        %856 = vmatpush.msra.mxu0 %v736
        %857 = vmatpush.msra.mxu0 %v734
        %858 = vmatpush.msra.mxu0 %v732
        %859 = vmatpush.msra.mxu0 %v730
        %860 = vmatpush.msra.mxu0 %v728
        %861 = vmatpush.msra.mxu0 %v726
        %862 = vmatpush.msra.mxu0 %v724
        %863 = vmatpush.msra.mxu0 %v722
        %864 = vmatpush.msra.mxu0 %v720
        %865 = vmatpush.msra.mxu0 %v718
        %866 = vmatpush.msra.mxu0 %v716
        %867 = vmatpush.msra.mxu0 %v714
        %868 = vmatpush.msra.mxu0 %v712
        %869 = vmatpush.msra.mxu0 %v710
        %870 = vmatpush.msra.mxu0 %v708
        %871 = vmatpush.msra.mxu0 %v706
        %872 = vmatmul.f32.gmra.mxu0 %v476
        %v873 = vpop.f32.mrf.mxu0
        %v874 = vadd.f32 %v740, %v873
        %875 = vmatmul.f32.gmra.mxu0 %v477
        %v876 = vpop.f32.mrf.mxu0
        %v877 = vadd.f32 %v740, %v876
        %878 = vmatmul.f32.gmra.mxu0 %v478
        %v879 = vpop.f32.mrf.mxu0
        %v880 = vadd.f32 %v740, %v879
        %881 = vmatmul.f32.gmra.mxu0 %v479
        %v882 = vpop.f32.mrf.mxu0
        %v883 = vadd.f32 %v740, %v882
        %884 = vmatmul.f32.gmra.mxu0 %v480
        %v885 = vpop.f32.mrf.mxu0
        %v886 = vadd.f32 %v740, %v885
        %887 = vmatmul.f32.gmra.mxu0 %v481
        %v888 = vpop.f32.mrf.mxu0
        %v889 = vadd.f32 %v740, %v888
        %890 = vmatmul.f32.gmra.mxu0 %v482
        %v891 = vpop.f32.mrf.mxu0
        %v892 = vadd.f32 %v740, %v891
        %893 = vmatmul.f32.gmra.mxu0 %v483
        %v894 = vpop.f32.mrf.mxu0
        %v895 = vadd.f32 %v740, %v894
        %896 = vmatmul.f32.gmra.mxu0 %v484
        %v897 = vpop.f32.mrf.mxu0
        %v898 = vadd.f32 %v740, %v897
        %899 = vmatmul.f32.gmra.mxu0 %v485
        %v900 = vpop.f32.mrf.mxu0
        %v901 = vadd.f32 %v740, %v900
        %902 = vmatmul.f32.gmra.mxu0 %v486
        %v903 = vpop.f32.mrf.mxu0
        %v904 = vadd.f32 %v740, %v903
        %905 = vmatmul.f32.gmra.mxu0 %v487
        %v906 = vpop.f32.mrf.mxu0
        %v907 = vadd.f32 %v740, %v906
        %908 = vmatmul.f32.gmra.mxu0 %v488
        %v909 = vpop.f32.mrf.mxu0
        %v910 = vadd.f32 %v740, %v909
        %911 = vmatmul.f32.gmra.mxu0 %v489
        %v912 = vpop.f32.mrf.mxu0
        %v913 = vadd.f32 %v740, %v912
        %914 = vmatmul.f32.gmra.mxu0 %v490
        %v915 = vpop.f32.mrf.mxu0
        %v916 = vadd.f32 %v740, %v915
        %917 = vmatmul.f32.gmra.mxu0 %v491
        %v918 = vpop.f32.mrf.mxu0
        %v919 = vadd.f32 %v740, %v918
        %920 = vmatmul.f32.gmra.mxu0 %v492
        %v921 = vpop.f32.mrf.mxu0
        %v922 = vadd.f32 %v740, %v921
        %923 = vmatmul.f32.gmra.mxu0 %v493
        %v924 = vpop.f32.mrf.mxu0
        %v925 = vadd.f32 %v740, %v924
        %926 = vmatmul.f32.gmra.mxu0 %v494
        %v927 = vpop.f32.mrf.mxu0
        %v928 = vadd.f32 %v740, %v927
        %929 = vmatmul.f32.gmra.mxu0 %v495
        %v930 = vpop.f32.mrf.mxu0
        %v931 = vadd.f32 %v740, %v930
        %932 = vmatmul.f32.gmra.mxu0 %v496
        %v933 = vpop.f32.mrf.mxu0
        %v934 = vadd.f32 %v740, %v933
        %935 = vmatmul.f32.gmra.mxu0 %v497
        %v936 = vpop.f32.mrf.mxu0
        %v937 = vadd.f32 %v740, %v936
        %938 = vmatmul.f32.gmra.mxu0 %v498
        %v939 = vpop.f32.mrf.mxu0
        %v940 = vadd.f32 %v740, %v939
        %941 = vmatmul.f32.gmra.mxu0 %v499
        %v942 = vpop.f32.mrf.mxu0
        %v943 = vadd.f32 %v740, %v942
        %944 = vmatmul.f32.gmra.mxu0 %v500
        %v945 = vpop.f32.mrf.mxu0
        %v946 = vadd.f32 %v740, %v945
        %947 = vmatmul.f32.gmra.mxu0 %v501
        %v948 = vpop.f32.mrf.mxu0
        %v949 = vadd.f32 %v740, %v948
        %950 = vmatmul.f32.gmra.mxu0 %v502
        %v951 = vpop.f32.mrf.mxu0
        %v952 = vadd.f32 %v740, %v951
        %953 = vmatmul.f32.gmra.mxu0 %v503
        %v954 = vpop.f32.mrf.mxu0
        %v955 = vadd.f32 %v740, %v954
        %956 = vmatmul.f32.gmra.mxu0 %v504
        %v957 = vpop.f32.mrf.mxu0
        %v958 = vadd.f32 %v740, %v957
        %959 = vmatmul.f32.gmra.mxu0 %v505
        %v960 = vpop.f32.mrf.mxu0
        %v961 = vadd.f32 %v740, %v960
        %962 = vmatmul.f32.gmra.mxu0 %v506
        %v963 = vpop.f32.mrf.mxu0
        %v964 = vadd.f32 %v740, %v963
        %965 = vmatmul.f32.gmra.mxu0 %v507
        %v966 = vpop.f32.mrf.mxu0
        %v967 = vadd.f32 %v740, %v966
        %968 = vdwg.mxu0
        %969 = vmatpush.xpose.msra.mxu0 %v806
        %970 = vmatpush.xpose.msra.mxu0 %v803
        %971 = vmatpush.xpose.msra.mxu0 %v800
        %972 = vmatpush.xpose.msra.mxu0 %v797
        %973 = vmatpush.xpose.msra.mxu0 %v794
        %974 = vmatpush.xpose.msra.mxu0 %v791
        %975 = vmatpush.xpose.msra.mxu0 %v788
        %976 = vmatpush.xpose.msra.mxu0 %v785
        %977 = vmatpush.xpose.msra.mxu0 %v782
        %978 = vmatpush.xpose.msra.mxu0 %v779
        %979 = vmatpush.xpose.msra.mxu0 %v776
        %980 = vmatpush.xpose.msra.mxu0 %v773
        %981 = vmatpush.xpose.msra.mxu0 %v770
        %982 = vmatpush.xpose.msra.mxu0 %v767
        %983 = vmatpush.xpose.msra.mxu0 %v764
        %984 = vmatpush.xpose.msra.mxu0 %v761
        %985 = vmatmul.f32.gmra.mxu0 %v673
        %v986 = vpop.f32.mrf.mxu0
        %v987 = vadd.f32 0.0, %v986
        %988 = vmatmul.f32.gmra.mxu0 %v674
        %v989 = vpop.f32.mrf.mxu0
        %v990 = vadd.f32 0.0, %v989
        %991 = vmatmul.f32.gmra.mxu0 %v675
        %v992 = vpop.f32.mrf.mxu0
        %v993 = vadd.f32 0.0, %v992
        %994 = vmatmul.f32.gmra.mxu0 %v676
        %v995 = vpop.f32.mrf.mxu0
        %v996 = vadd.f32 0.0, %v995
        %997 = vmatmul.f32.gmra.mxu0 %v677
        %v998 = vpop.f32.mrf.mxu0
        %v999 = vadd.f32 0.0, %v998
        %1000 = vmatmul.f32.gmra.mxu0 %v678
        %v1001 = vpop.f32.mrf.mxu0
        %v1002 = vadd.f32 0.0, %v1001
        %1003 = vmatmul.f32.gmra.mxu0 %v679
        %v1004 = vpop.f32.mrf.mxu0
        %v1005 = vadd.f32 0.0, %v1004
        %1006 = vmatmul.f32.gmra.mxu0 %v680
        %v1007 = vpop.f32.mrf.mxu0
        %v1008 = vadd.f32 0.0, %v1007
        %1009 = vmatmul.f32.gmra.mxu0 %v681
        %v1010 = vpop.f32.mrf.mxu0
        %v1011 = vadd.f32 0.0, %v1010
        %1012 = vmatmul.f32.gmra.mxu0 %v682
        %v1013 = vpop.f32.mrf.mxu0
        %v1014 = vadd.f32 0.0, %v1013
        %1015 = vmatmul.f32.gmra.mxu0 %v683
        %v1016 = vpop.f32.mrf.mxu0
        %v1017 = vadd.f32 0.0, %v1016
        %1018 = vmatmul.f32.gmra.mxu0 %v684
        %v1019 = vpop.f32.mrf.mxu0
        %v1020 = vadd.f32 0.0, %v1019
        %1021 = vmatmul.f32.gmra.mxu0 %v685
        %v1022 = vpop.f32.mrf.mxu0
        %v1023 = vadd.f32 0.0, %v1022
        %1024 = vmatmul.f32.gmra.mxu0 %v686
        %v1025 = vpop.f32.mrf.mxu0
        %v1026 = vadd.f32 0.0, %v1025
        %1027 = vmatmul.f32.gmra.mxu0 %v687
        %v1028 = vpop.f32.mrf.mxu0
        %v1029 = vadd.f32 0.0, %v1028
        %1030 = vmatmul.f32.gmra.mxu0 %v688
        %v1031 = vpop.f32.mrf.mxu0
        %v1032 = vadd.f32 0.0, %v1031
        %1033 = vdwg.mxu0
        %1034 = vmatpush.xpose.msra.mxu0 %v854
        %1035 = vmatpush.xpose.msra.mxu0 %v851
        %1036 = vmatpush.xpose.msra.mxu0 %v848
        %1037 = vmatpush.xpose.msra.mxu0 %v845
        %1038 = vmatpush.xpose.msra.mxu0 %v842
        %1039 = vmatpush.xpose.msra.mxu0 %v839
        %1040 = vmatpush.xpose.msra.mxu0 %v836
        %1041 = vmatpush.xpose.msra.mxu0 %v833
        %1042 = vmatpush.xpose.msra.mxu0 %v830
        %1043 = vmatpush.xpose.msra.mxu0 %v827
        %1044 = vmatpush.xpose.msra.mxu0 %v824
        %1045 = vmatpush.xpose.msra.mxu0 %v821
        %1046 = vmatpush.xpose.msra.mxu0 %v818
        %1047 = vmatpush.xpose.msra.mxu0 %v815
        %1048 = vmatpush.xpose.msra.mxu0 %v812
        %1049 = vmatpush.xpose.msra.mxu0 %v809
        %1050 = vmatmul.f32.gmra.mxu0 %v689
        %v1051 = vpop.f32.mrf.mxu0
        %v1052 = vadd.f32 0.0, %v1051
        %1053 = vmatmul.f32.gmra.mxu0 %v690
        %v1054 = vpop.f32.mrf.mxu0
        %v1055 = vadd.f32 0.0, %v1054
        %1056 = vmatmul.f32.gmra.mxu0 %v691
        %v1057 = vpop.f32.mrf.mxu0
        %v1058 = vadd.f32 0.0, %v1057
        %1059 = vmatmul.f32.gmra.mxu0 %v692
        %v1060 = vpop.f32.mrf.mxu0
        %v1061 = vadd.f32 0.0, %v1060
        %1062 = vmatmul.f32.gmra.mxu0 %v693
        %v1063 = vpop.f32.mrf.mxu0
        %v1064 = vadd.f32 0.0, %v1063
        %1065 = vmatmul.f32.gmra.mxu0 %v694
        %v1066 = vpop.f32.mrf.mxu0
        %v1067 = vadd.f32 0.0, %v1066
        %1068 = vmatmul.f32.gmra.mxu0 %v695
        %v1069 = vpop.f32.mrf.mxu0
        %v1070 = vadd.f32 0.0, %v1069
        %1071 = vmatmul.f32.gmra.mxu0 %v696
        %v1072 = vpop.f32.mrf.mxu0
        %v1073 = vadd.f32 0.0, %v1072
        %1074 = vmatmul.f32.gmra.mxu0 %v697
        %v1075 = vpop.f32.mrf.mxu0
        %v1076 = vadd.f32 0.0, %v1075
        %1077 = vmatmul.f32.gmra.mxu0 %v698
        %v1078 = vpop.f32.mrf.mxu0
        %v1079 = vadd.f32 0.0, %v1078
        %1080 = vmatmul.f32.gmra.mxu0 %v699
        %v1081 = vpop.f32.mrf.mxu0
        %v1082 = vadd.f32 0.0, %v1081
        %1083 = vmatmul.f32.gmra.mxu0 %v700
        %v1084 = vpop.f32.mrf.mxu0
        %v1085 = vadd.f32 0.0, %v1084
        %1086 = vmatmul.f32.gmra.mxu0 %v701
        %v1087 = vpop.f32.mrf.mxu0
        %v1088 = vadd.f32 0.0, %v1087
        %1089 = vmatmul.f32.gmra.mxu0 %v702
        %v1090 = vpop.f32.mrf.mxu0
        %v1091 = vadd.f32 0.0, %v1090
        %1092 = vmatmul.f32.gmra.mxu0 %v703
        %v1093 = vpop.f32.mrf.mxu0
        %v1094 = vadd.f32 0.0, %v1093
        %1095 = vmatmul.f32.gmra.mxu0 %v704
        %v1096 = vpop.f32.mrf.mxu0
        %v1097 = vadd.f32 0.0, %v1096
        %1098 = vdwg.mxu0
        %1099 = vmax.xlane.f32.xlu0 %v987
        %v1100 = vpop.xlane.xlu0 %1099
        %1101 = vmax.xlane.f32.xlu0 %v990
        %v1102 = vpop.xlane.xlu0 %1101
        %1103 = vmax.xlane.f32.xlu0 %v993
        %v1104 = vpop.xlane.xlu0 %1103
        %1105 = vmax.xlane.f32.xlu0 %v996
        %v1106 = vpop.xlane.xlu0 %1105
        %1107 = vmax.xlane.f32.xlu0 %v999
        %v1108 = vpop.xlane.xlu0 %1107
        %1109 = vmax.xlane.f32.xlu0 %v1002
        %v1110 = vpop.xlane.xlu0 %1109
        %1111 = vmax.xlane.f32.xlu0 %v1005
        %v1112 = vpop.xlane.xlu0 %1111
        %1113 = vmax.xlane.f32.xlu0 %v1008
        %v1114 = vpop.xlane.xlu0 %1113
        %1115 = vmax.xlane.f32.xlu0 %v1011
        %v1116 = vpop.xlane.xlu0 %1115
        %1117 = vmax.xlane.f32.xlu0 %v1014
        %v1118 = vpop.xlane.xlu0 %1117
        %1119 = vmax.xlane.f32.xlu0 %v1017
        %v1120 = vpop.xlane.xlu0 %1119
        %1121 = vmax.xlane.f32.xlu0 %v1020
        %v1122 = vpop.xlane.xlu0 %1121
        %1123 = vmax.xlane.f32.xlu0 %v1023
        %v1124 = vpop.xlane.xlu0 %1123
        %1125 = vmax.xlane.f32.xlu0 %v1026
        %v1126 = vpop.xlane.xlu0 %1125
        %1127 = vmax.xlane.f32.xlu0 %v1029
        %v1128 = vpop.xlane.xlu0 %1127
        %1129 = vmax.xlane.f32.xlu0 %v1032
        %v1130 = vpop.xlane.xlu0 %1129
        %1131 = vmax.xlane.f32.xlu0 %v1052
        %v1132 = vpop.xlane.xlu0 %1131
        %1133 = vmax.xlane.f32.xlu0 %v1055
        %v1134 = vpop.xlane.xlu0 %1133
        %1135 = vmax.xlane.f32.xlu0 %v1058
        %v1136 = vpop.xlane.xlu0 %1135
        %1137 = vmax.xlane.f32.xlu0 %v1061
        %v1138 = vpop.xlane.xlu0 %1137
        %1139 = vmax.xlane.f32.xlu0 %v1064
        %v1140 = vpop.xlane.xlu0 %1139
        %1141 = vmax.xlane.f32.xlu0 %v1067
        %v1142 = vpop.xlane.xlu0 %1141
        %1143 = vmax.xlane.f32.xlu0 %v1070
        %v1144 = vpop.xlane.xlu0 %1143
        %1145 = vmax.xlane.f32.xlu0 %v1073
        %v1146 = vpop.xlane.xlu0 %1145
        %1147 = vmax.xlane.f32.xlu0 %v1076
        %v1148 = vpop.xlane.xlu0 %1147
        %1149 = vmax.xlane.f32.xlu0 %v1079
        %v1150 = vpop.xlane.xlu0 %1149
        %1151 = vmax.xlane.f32.xlu0 %v1082
        %v1152 = vpop.xlane.xlu0 %1151
        %1153 = vmax.xlane.f32.xlu0 %v1085
        %v1154 = vpop.xlane.xlu0 %1153
        %1155 = vmax.xlane.f32.xlu0 %v1088
        %v1156 = vpop.xlane.xlu0 %1155
        %1157 = vmax.xlane.f32.xlu0 %v1091
        %v1158 = vpop.xlane.xlu0 %1157
        %1159 = vmax.xlane.f32.xlu0 %v1094
        %v1160 = vpop.xlane.xlu0 %1159
        %1161 = vmax.xlane.f32.xlu0 %v1097
        %v1162 = vpop.xlane.xlu0 %1161
        %v1163 = vsub.f32 %v987, %v1100
        %v1164 = vsub.f32 %v990, %v1102
        %v1165 = vsub.f32 %v993, %v1104
        %v1166 = vsub.f32 %v996, %v1106
        %v1167 = vsub.f32 %v999, %v1108
        %v1168 = vsub.f32 %v1002, %v1110
        %v1169 = vsub.f32 %v1005, %v1112
        %v1170 = vsub.f32 %v1008, %v1114
        %v1171 = vsub.f32 %v1011, %v1116
        %v1172 = vsub.f32 %v1014, %v1118
        %v1173 = vsub.f32 %v1017, %v1120
        %v1174 = vsub.f32 %v1020, %v1122
        %v1175 = vsub.f32 %v1023, %v1124
        %v1176 = vsub.f32 %v1026, %v1126
        %v1177 = vsub.f32 %v1029, %v1128
        %v1178 = vsub.f32 %v1032, %v1130
        %v1179 = vsub.f32 %v1052, %v1132
        %v1180 = vsub.f32 %v1055, %v1134
        %v1181 = vsub.f32 %v1058, %v1136
        %v1182 = vsub.f32 %v1061, %v1138
        %v1183 = vsub.f32 %v1064, %v1140
        %v1184 = vsub.f32 %v1067, %v1142
        %v1185 = vsub.f32 %v1070, %v1144
        %v1186 = vsub.f32 %v1073, %v1146
        %v1187 = vsub.f32 %v1076, %v1148
        %v1188 = vsub.f32 %v1079, %v1150
        %v1189 = vsub.f32 %v1082, %v1152
        %v1190 = vsub.f32 %v1085, %v1154
        %v1191 = vsub.f32 %v1088, %v1156
        %v1192 = vsub.f32 %v1091, %v1158
        %v1193 = vsub.f32 %v1094, %v1160
        %v1194 = vsub.f32 %v1097, %v1162
        %v1195 = vmul.f32 %v1163, 1.442695
        %v1196 = vpow.pop %v1195
        %v1197 = vmul.f32 %v1164, 1.442695
        %v1198 = vpow.pop %v1197
        %v1199 = vmul.f32 %v1165, 1.442695
        %v1200 = vpow.pop %v1199
        %v1201 = vmul.f32 %v1166, 1.442695
        %v1202 = vpow.pop %v1201
        %v1203 = vmul.f32 %v1167, 1.442695
        %v1204 = vpow.pop %v1203
        %v1205 = vmul.f32 %v1168, 1.442695
        %v1206 = vpow.pop %v1205
        %v1207 = vmul.f32 %v1169, 1.442695
        %v1208 = vpow.pop %v1207
        %v1209 = vmul.f32 %v1170, 1.442695
        %v1210 = vpow.pop %v1209
        %v1211 = vmul.f32 %v1171, 1.442695
        %v1212 = vpow.pop %v1211
        %v1213 = vmul.f32 %v1172, 1.442695
        %v1214 = vpow.pop %v1213
        %v1215 = vmul.f32 %v1173, 1.442695
        %v1216 = vpow.pop %v1215
        %v1217 = vmul.f32 %v1174, 1.442695
        %v1218 = vpow.pop %v1217
        %v1219 = vmul.f32 %v1175, 1.442695
        %v1220 = vpow.pop %v1219
        %v1221 = vmul.f32 %v1176, 1.442695
        %v1222 = vpow.pop %v1221
        %v1223 = vmul.f32 %v1177, 1.442695
        %v1224 = vpow.pop %v1223
        %v1225 = vmul.f32 %v1178, 1.442695
        %v1226 = vpow.pop %v1225
        %v1227 = vmul.f32 %v1179, 1.442695
        %v1228 = vpow.pop %v1227
        %v1229 = vmul.f32 %v1180, 1.442695
        %v1230 = vpow.pop %v1229
        %v1231 = vmul.f32 %v1181, 1.442695
        %v1232 = vpow.pop %v1231
        %v1233 = vmul.f32 %v1182, 1.442695
        %v1234 = vpow.pop %v1233
        %v1235 = vmul.f32 %v1183, 1.442695
        %v1236 = vpow.pop %v1235
        %v1237 = vmul.f32 %v1184, 1.442695
        %v1238 = vpow.pop %v1237
        %v1239 = vmul.f32 %v1185, 1.442695
        %v1240 = vpow.pop %v1239
        %v1241 = vmul.f32 %v1186, 1.442695
        %v1242 = vpow.pop %v1241
        %v1243 = vmul.f32 %v1187, 1.442695
        %v1244 = vpow.pop %v1243
        %v1245 = vmul.f32 %v1188, 1.442695
        %v1246 = vpow.pop %v1245
        %v1247 = vmul.f32 %v1189, 1.442695
        %v1248 = vpow.pop %v1247
        %v1249 = vmul.f32 %v1190, 1.442695
        %v1250 = vpow.pop %v1249
        %v1251 = vmul.f32 %v1191, 1.442695
        %v1252 = vpow.pop %v1251
        %v1253 = vmul.f32 %v1192, 1.442695
        %v1254 = vpow.pop %v1253
        %v1255 = vmul.f32 %v1193, 1.442695
        %v1256 = vpow.pop %v1255
        %v1257 = vmul.f32 %v1194, 1.442695
        %v1258 = vpow.pop %v1257
        %1259 = vadd.xlane.f32.xlu0 %v1196
        %v1260 = vpop.xlane.xlu0 %1259
        %1261 = vadd.xlane.f32.xlu0 %v1198
        %v1262 = vpop.xlane.xlu0 %1261
        %1263 = vadd.xlane.f32.xlu0 %v1200
        %v1264 = vpop.xlane.xlu0 %1263
        %1265 = vadd.xlane.f32.xlu0 %v1202
        %v1266 = vpop.xlane.xlu0 %1265
        %1267 = vadd.xlane.f32.xlu0 %v1204
        %v1268 = vpop.xlane.xlu0 %1267
        %1269 = vadd.xlane.f32.xlu0 %v1206
        %v1270 = vpop.xlane.xlu0 %1269
        %1271 = vadd.xlane.f32.xlu0 %v1208
        %v1272 = vpop.xlane.xlu0 %1271
        %1273 = vadd.xlane.f32.xlu0 %v1210
        %v1274 = vpop.xlane.xlu0 %1273
        %1275 = vadd.xlane.f32.xlu0 %v1212
        %v1276 = vpop.xlane.xlu0 %1275
        %1277 = vadd.xlane.f32.xlu0 %v1214
        %v1278 = vpop.xlane.xlu0 %1277
        %1279 = vadd.xlane.f32.xlu0 %v1216
        %v1280 = vpop.xlane.xlu0 %1279
        %1281 = vadd.xlane.f32.xlu0 %v1218
        %v1282 = vpop.xlane.xlu0 %1281
        %1283 = vadd.xlane.f32.xlu0 %v1220
        %v1284 = vpop.xlane.xlu0 %1283
        %1285 = vadd.xlane.f32.xlu0 %v1222
        %v1286 = vpop.xlane.xlu0 %1285
        %1287 = vadd.xlane.f32.xlu0 %v1224
        %v1288 = vpop.xlane.xlu0 %1287
        %1289 = vadd.xlane.f32.xlu0 %v1226
        %v1290 = vpop.xlane.xlu0 %1289
        %1291 = vadd.xlane.f32.xlu0 %v1228
        %v1292 = vpop.xlane.xlu0 %1291
        %1293 = vadd.xlane.f32.xlu0 %v1230
        %v1294 = vpop.xlane.xlu0 %1293
        %1295 = vadd.xlane.f32.xlu0 %v1232
        %v1296 = vpop.xlane.xlu0 %1295
        %1297 = vadd.xlane.f32.xlu0 %v1234
        %v1298 = vpop.xlane.xlu0 %1297
        %1299 = vadd.xlane.f32.xlu0 %v1236
        %v1300 = vpop.xlane.xlu0 %1299
        %1301 = vadd.xlane.f32.xlu0 %v1238
        %v1302 = vpop.xlane.xlu0 %1301
        %1303 = vadd.xlane.f32.xlu0 %v1240
        %v1304 = vpop.xlane.xlu0 %1303
        %1305 = vadd.xlane.f32.xlu0 %v1242
        %v1306 = vpop.xlane.xlu0 %1305
        %1307 = vadd.xlane.f32.xlu0 %v1244
        %v1308 = vpop.xlane.xlu0 %1307
        %1309 = vadd.xlane.f32.xlu0 %v1246
        %v1310 = vpop.xlane.xlu0 %1309
        %1311 = vadd.xlane.f32.xlu0 %v1248
        %v1312 = vpop.xlane.xlu0 %1311
        %1313 = vadd.xlane.f32.xlu0 %v1250
        %v1314 = vpop.xlane.xlu0 %1313
        %1315 = vadd.xlane.f32.xlu0 %v1252
        %v1316 = vpop.xlane.xlu0 %1315
        %1317 = vadd.xlane.f32.xlu0 %v1254
        %v1318 = vpop.xlane.xlu0 %1317
        %1319 = vadd.xlane.f32.xlu0 %v1256
        %v1320 = vpop.xlane.xlu0 %1319
        %1321 = vadd.xlane.f32.xlu0 %v1258
        %v1322 = vpop.xlane.xlu0 %1321
        %v1323 = vrcp.pop %v1260
        %v1324 = vrcp.pop %v1262
        %v1325 = vrcp.pop %v1264
        %v1326 = vrcp.pop %v1266
        %v1327 = vrcp.pop %v1268
        %v1328 = vrcp.pop %v1270
        %v1329 = vrcp.pop %v1272
        %v1330 = vrcp.pop %v1274
        %v1331 = vrcp.pop %v1276
        %v1332 = vrcp.pop %v1278
        %v1333 = vrcp.pop %v1280
        %v1334 = vrcp.pop %v1282
        %v1335 = vrcp.pop %v1284
        %v1336 = vrcp.pop %v1286
        %v1337 = vrcp.pop %v1288
        %v1338 = vrcp.pop %v1290
        %v1339 = vrcp.pop %v1292
        %v1340 = vrcp.pop %v1294
        %v1341 = vrcp.pop %v1296
        %v1342 = vrcp.pop %v1298
        %v1343 = vrcp.pop %v1300
        %v1344 = vrcp.pop %v1302
        %v1345 = vrcp.pop %v1304
        %v1346 = vrcp.pop %v1306
        %v1347 = vrcp.pop %v1308
        %v1348 = vrcp.pop %v1310
        %v1349 = vrcp.pop %v1312
        %v1350 = vrcp.pop %v1314
        %v1351 = vrcp.pop %v1316
        %v1352 = vrcp.pop %v1318
        %v1353 = vrcp.pop %v1320
        %v1354 = vrcp.pop %v1322
        %v1355 = vmul.f32 %v1196, %v1323
        %v1356 = vmul.f32 %v1198, %v1324
        %v1357 = vmul.f32 %v1200, %v1325
        %v1358 = vmul.f32 %v1202, %v1326
        %v1359 = vmul.f32 %v1204, %v1327
        %v1360 = vmul.f32 %v1206, %v1328
        %v1361 = vmul.f32 %v1208, %v1329
        %v1362 = vmul.f32 %v1210, %v1330
        %v1363 = vmul.f32 %v1212, %v1331
        %v1364 = vmul.f32 %v1214, %v1332
        %v1365 = vmul.f32 %v1216, %v1333
        %v1366 = vmul.f32 %v1218, %v1334
        %v1367 = vmul.f32 %v1220, %v1335
        %v1368 = vmul.f32 %v1222, %v1336
        %v1369 = vmul.f32 %v1224, %v1337
        %v1370 = vmul.f32 %v1226, %v1338
        %v1371 = vmul.f32 %v1228, %v1339
        %v1372 = vmul.f32 %v1230, %v1340
        %v1373 = vmul.f32 %v1232, %v1341
        %v1374 = vmul.f32 %v1234, %v1342
        %v1375 = vmul.f32 %v1236, %v1343
        %v1376 = vmul.f32 %v1238, %v1344
        %v1377 = vmul.f32 %v1240, %v1345
        %v1378 = vmul.f32 %v1242, %v1346
        %v1379 = vmul.f32 %v1244, %v1347
        %v1380 = vmul.f32 %v1246, %v1348
        %v1381 = vmul.f32 %v1248, %v1349
        %v1382 = vmul.f32 %v1250, %v1350
        %v1383 = vmul.f32 %v1252, %v1351
        %v1384 = vmul.f32 %v1254, %v1352
        %v1385 = vmul.f32 %v1256, %v1353
        %v1386 = vmul.f32 %v1258, %v1354
        %1387 = vst [vmem:[%s471] sm:$0xff] %v1355
        %1388 = vst [vmem:[%s471 + $0x8] sm:$0xff] %v1356
        %1389 = vst [vmem:[%s471 + $0x10] sm:$0xff] %v1357
        %1390 = vst [vmem:[%s471 + $0x18] sm:$0xff] %v1358
        %1391 = vst [vmem:[%s471 + $0x20] sm:$0xff] %v1359
        %1392 = vst [vmem:[%s471 + $0x28] sm:$0xff] %v1360
        %1393 = vst [vmem:[%s471 + $0x30] sm:$0xff] %v1361
        %1394 = vst [vmem:[%s471 + $0x38] sm:$0xff] %v1362
        %1395 = vst [vmem:[%s471 + $0x40] sm:$0xff] %v1363
        %1396 = vst [vmem:[%s471 + $0x48] sm:$0xff] %v1364
        %1397 = vst [vmem:[%s471 + $0x50] sm:$0xff] %v1365
        %1398 = vst [vmem:[%s471 + $0x58] sm:$0xff] %v1366
        %1399 = vst [vmem:[%s471 + $0x60] sm:$0xff] %v1367
        %1400 = vst [vmem:[%s471 + $0x68] sm:$0xff] %v1368
        %1401 = vst [vmem:[%s471 + $0x70] sm:$0xff] %v1369
        %1402 = vst [vmem:[%s471 + $0x78] sm:$0xff] %v1370
        %1403 = vst [vmem:[%s471 + $0x80] sm:$0xff] %v1371
        %1404 = vst [vmem:[%s471 + $0x88] sm:$0xff] %v1372
        %1405 = vst [vmem:[%s471 + $0x90] sm:$0xff] %v1373
        %1406 = vst [vmem:[%s471 + $0x98] sm:$0xff] %v1374
        %1407 = vst [vmem:[%s471 + $0xa0] sm:$0xff] %v1375
        %1408 = vst [vmem:[%s471 + $0xa8] sm:$0xff] %v1376
        %1409 = vst [vmem:[%s471 + $0xb0] sm:$0xff] %v1377
        %1410 = vst [vmem:[%s471 + $0xb8] sm:$0xff] %v1378
        %1411 = vst [vmem:[%s471 + $0xc0] sm:$0xff] %v1379
        %1412 = vst [vmem:[%s471 + $0xc8] sm:$0xff] %v1380
        %1413 = vst [vmem:[%s471 + $0xd0] sm:$0xff] %v1381
        %1414 = vst [vmem:[%s471 + $0xd8] sm:$0xff] %v1382
        %1415 = vst [vmem:[%s471 + $0xe0] sm:$0xff] %v1383
        %1416 = vst [vmem:[%s471 + $0xe8] sm:$0xff] %v1384
        %1417 = vst [vmem:[%s471 + $0xf0] sm:$0xff] %v1385
        %1418 = vst [vmem:[%s471 + $0xf8] sm:$0xff] %v1386
        %1419 = vmatpush.msra.mxu0 %v919
        %1420 = vmatpush.msra.mxu0 %v916
        %1421 = vmatpush.msra.mxu0 %v913
        %1422 = vmatpush.msra.mxu0 %v910
        %1423 = vmatpush.msra.mxu0 %v907
        %1424 = vmatpush.msra.mxu0 %v904
        %1425 = vmatpush.msra.mxu0 %v901
        %1426 = vmatpush.msra.mxu0 %v898
        %1427 = vmatpush.msra.mxu0 %v895
        %1428 = vmatpush.msra.mxu0 %v892
        %1429 = vmatpush.msra.mxu0 %v889
        %1430 = vmatpush.msra.mxu0 %v886
        %1431 = vmatpush.msra.mxu0 %v883
        %1432 = vmatpush.msra.mxu0 %v880
        %1433 = vmatpush.msra.mxu0 %v877
        %1434 = vmatpush.msra.mxu0 %v874
        %1435 = vmatmul.f32.gmra.mxu0 %v1355
        %v1436 = vpop.f32.mrf.mxu0
        %v1437 = vadd.f32 0.0, %v1436
        %1438 = vmatmul.f32.gmra.mxu0 %v1356
        %v1439 = vpop.f32.mrf.mxu0
        %v1440 = vadd.f32 0.0, %v1439
        %1441 = vmatmul.f32.gmra.mxu0 %v1357
        %v1442 = vpop.f32.mrf.mxu0
        %v1443 = vadd.f32 0.0, %v1442
        %1444 = vmatmul.f32.gmra.mxu0 %v1358
        %v1445 = vpop.f32.mrf.mxu0
        %v1446 = vadd.f32 0.0, %v1445
        %1447 = vmatmul.f32.gmra.mxu0 %v1359
        %v1448 = vpop.f32.mrf.mxu0
        %v1449 = vadd.f32 0.0, %v1448
        %1450 = vmatmul.f32.gmra.mxu0 %v1360
        %v1451 = vpop.f32.mrf.mxu0
        %v1452 = vadd.f32 0.0, %v1451
        %1453 = vmatmul.f32.gmra.mxu0 %v1361
        %v1454 = vpop.f32.mrf.mxu0
        %v1455 = vadd.f32 0.0, %v1454
        %1456 = vmatmul.f32.gmra.mxu0 %v1362
        %v1457 = vpop.f32.mrf.mxu0
        %v1458 = vadd.f32 0.0, %v1457
        %1459 = vmatmul.f32.gmra.mxu0 %v1363
        %v1460 = vpop.f32.mrf.mxu0
        %v1461 = vadd.f32 0.0, %v1460
        %1462 = vmatmul.f32.gmra.mxu0 %v1364
        %v1463 = vpop.f32.mrf.mxu0
        %v1464 = vadd.f32 0.0, %v1463
        %1465 = vmatmul.f32.gmra.mxu0 %v1365
        %v1466 = vpop.f32.mrf.mxu0
        %v1467 = vadd.f32 0.0, %v1466
        %1468 = vmatmul.f32.gmra.mxu0 %v1366
        %v1469 = vpop.f32.mrf.mxu0
        %v1470 = vadd.f32 0.0, %v1469
        %1471 = vmatmul.f32.gmra.mxu0 %v1367
        %v1472 = vpop.f32.mrf.mxu0
        %v1473 = vadd.f32 0.0, %v1472
        %1474 = vmatmul.f32.gmra.mxu0 %v1368
        %v1475 = vpop.f32.mrf.mxu0
        %v1476 = vadd.f32 0.0, %v1475
        %1477 = vmatmul.f32.gmra.mxu0 %v1369
        %v1478 = vpop.f32.mrf.mxu0
        %v1479 = vadd.f32 0.0, %v1478
        %1480 = vmatmul.f32.gmra.mxu0 %v1370
        %v1481 = vpop.f32.mrf.mxu0
        %v1482 = vadd.f32 0.0, %v1481
        %1483 = vdwg.mxu0
        %1484 = vmatpush.msra.mxu0 %v967
        %1485 = vmatpush.msra.mxu0 %v964
        %1486 = vmatpush.msra.mxu0 %v961
        %1487 = vmatpush.msra.mxu0 %v958
        %1488 = vmatpush.msra.mxu0 %v955
        %1489 = vmatpush.msra.mxu0 %v952
        %1490 = vmatpush.msra.mxu0 %v949
        %1491 = vmatpush.msra.mxu0 %v946
        %1492 = vmatpush.msra.mxu0 %v943
        %1493 = vmatpush.msra.mxu0 %v940
        %1494 = vmatpush.msra.mxu0 %v937
        %1495 = vmatpush.msra.mxu0 %v934
        %1496 = vmatpush.msra.mxu0 %v931
        %1497 = vmatpush.msra.mxu0 %v928
        %1498 = vmatpush.msra.mxu0 %v925
        %1499 = vmatpush.msra.mxu0 %v922
        %1500 = vmatmul.f32.gmra.mxu0 %v1371
        %v1501 = vpop.f32.mrf.mxu0
        %v1502 = vadd.f32 0.0, %v1501
        %1503 = vmatmul.f32.gmra.mxu0 %v1372
        %v1504 = vpop.f32.mrf.mxu0
        %v1505 = vadd.f32 0.0, %v1504
        %1506 = vmatmul.f32.gmra.mxu0 %v1373
        %v1507 = vpop.f32.mrf.mxu0
        %v1508 = vadd.f32 0.0, %v1507
        %1509 = vmatmul.f32.gmra.mxu0 %v1374
        %v1510 = vpop.f32.mrf.mxu0
        %v1511 = vadd.f32 0.0, %v1510
        %1512 = vmatmul.f32.gmra.mxu0 %v1375
        %v1513 = vpop.f32.mrf.mxu0
        %v1514 = vadd.f32 0.0, %v1513
        %1515 = vmatmul.f32.gmra.mxu0 %v1376
        %v1516 = vpop.f32.mrf.mxu0
        %v1517 = vadd.f32 0.0, %v1516
        %1518 = vmatmul.f32.gmra.mxu0 %v1377
        %v1519 = vpop.f32.mrf.mxu0
        %v1520 = vadd.f32 0.0, %v1519
        %1521 = vmatmul.f32.gmra.mxu0 %v1378
        %v1522 = vpop.f32.mrf.mxu0
        %v1523 = vadd.f32 0.0, %v1522
        %1524 = vmatmul.f32.gmra.mxu0 %v1379
        %v1525 = vpop.f32.mrf.mxu0
        %v1526 = vadd.f32 0.0, %v1525
        %1527 = vmatmul.f32.gmra.mxu0 %v1380
        %v1528 = vpop.f32.mrf.mxu0
        %v1529 = vadd.f32 0.0, %v1528
        %1530 = vmatmul.f32.gmra.mxu0 %v1381
        %v1531 = vpop.f32.mrf.mxu0
        %v1532 = vadd.f32 0.0, %v1531
        %1533 = vmatmul.f32.gmra.mxu0 %v1382
        %v1534 = vpop.f32.mrf.mxu0
        %v1535 = vadd.f32 0.0, %v1534
        %1536 = vmatmul.f32.gmra.mxu0 %v1383
        %v1537 = vpop.f32.mrf.mxu0
        %v1538 = vadd.f32 0.0, %v1537
        %1539 = vmatmul.f32.gmra.mxu0 %v1384
        %v1540 = vpop.f32.mrf.mxu0
        %v1541 = vadd.f32 0.0, %v1540
        %1542 = vmatmul.f32.gmra.mxu0 %v1385
        %v1543 = vpop.f32.mrf.mxu0
        %v1544 = vadd.f32 0.0, %v1543
        %1545 = vmatmul.f32.gmra.mxu0 %v1386
        %v1546 = vpop.f32.mrf.mxu0
        %v1547 = vadd.f32 0.0, %v1546
        %1548 = vdwg.mxu0
        %v1549 = vld [vmem:[#allocation11] sm:$0xff]
        %v1550 = vld [vmem:[#allocation11 + $0x8] sm:$0xff]
        %v1551 = vld [vmem:[#allocation11 + $0x10] sm:$0xff]
        %v1552 = vld [vmem:[#allocation11 + $0x18] sm:$0xff]
        %v1553 = vld [vmem:[#allocation11 + $0x20] sm:$0xff]
        %v1554 = vld [vmem:[#allocation11 + $0x28] sm:$0xff]
        %v1555 = vld [vmem:[#allocation11 + $0x30] sm:$0xff]
        %v1556 = vld [vmem:[#allocation11 + $0x38] sm:$0xff]
        %v1557 = vld [vmem:[#allocation11 + $0x40] sm:$0xff]
        %v1558 = vld [vmem:[#allocation11 + $0x48] sm:$0xff]
        %v1559 = vld [vmem:[#allocation11 + $0x50] sm:$0xff]
        %v1560 = vld [vmem:[#allocation11 + $0x58] sm:$0xff]
        %v1561 = vld [vmem:[#allocation11 + $0x60] sm:$0xff]
        %v1562 = vld [vmem:[#allocation11 + $0x68] sm:$0xff]
        %v1563 = vld [vmem:[#allocation11 + $0x70] sm:$0xff]
        %v1564 = vld [vmem:[#allocation11 + $0x78] sm:$0xff]
        %v1565 = vld [vmem:[%s7] sm:$0x1]
        %v1567 = vperm.slane %v1565, 0
        %1569 = vmatpush.msra.mxu0 %v1564
        %1570 = vmatpush.msra.mxu0 %v1563
        %1571 = vmatpush.msra.mxu0 %v1562
        %1572 = vmatpush.msra.mxu0 %v1561
        %1573 = vmatpush.msra.mxu0 %v1560
        %1574 = vmatpush.msra.mxu0 %v1559
        %1575 = vmatpush.msra.mxu0 %v1558
        %1576 = vmatpush.msra.mxu0 %v1557
        %1577 = vmatpush.msra.mxu0 %v1556
        %1578 = vmatpush.msra.mxu0 %v1555
        %1579 = vmatpush.msra.mxu0 %v1554
        %1580 = vmatpush.msra.mxu0 %v1553
        %1581 = vmatpush.msra.mxu0 %v1552
        %1582 = vmatpush.msra.mxu0 %v1551
        %1583 = vmatpush.msra.mxu0 %v1550
        %1584 = vmatpush.msra.mxu0 %v1549
        %1585 = vmatmul.f32.gmra.mxu0 %v1437
        %v1586 = vpop.f32.mrf.mxu0
        %v1587 = vadd.f32 %v1567, %v1586
        %1588 = vmatmul.f32.gmra.mxu0 %v1440
        %v1589 = vpop.f32.mrf.mxu0
        %v1590 = vadd.f32 %v1567, %v1589
        %1591 = vmatmul.f32.gmra.mxu0 %v1443
        %v1592 = vpop.f32.mrf.mxu0
        %v1593 = vadd.f32 %v1567, %v1592
        %1594 = vmatmul.f32.gmra.mxu0 %v1446
        %v1595 = vpop.f32.mrf.mxu0
        %v1596 = vadd.f32 %v1567, %v1595
        %1597 = vmatmul.f32.gmra.mxu0 %v1449
        %v1598 = vpop.f32.mrf.mxu0
        %v1599 = vadd.f32 %v1567, %v1598
        %1600 = vmatmul.f32.gmra.mxu0 %v1452
        %v1601 = vpop.f32.mrf.mxu0
        %v1602 = vadd.f32 %v1567, %v1601
        %1603 = vmatmul.f32.gmra.mxu0 %v1455
        %v1604 = vpop.f32.mrf.mxu0
        %v1605 = vadd.f32 %v1567, %v1604
        %1606 = vmatmul.f32.gmra.mxu0 %v1458
        %v1607 = vpop.f32.mrf.mxu0
        %v1608 = vadd.f32 %v1567, %v1607
        %1609 = vmatmul.f32.gmra.mxu0 %v1461
        %v1610 = vpop.f32.mrf.mxu0
        %v1611 = vadd.f32 %v1567, %v1610
        %1612 = vmatmul.f32.gmra.mxu0 %v1464
        %v1613 = vpop.f32.mrf.mxu0
        %v1614 = vadd.f32 %v1567, %v1613
        %1615 = vmatmul.f32.gmra.mxu0 %v1467
        %v1616 = vpop.f32.mrf.mxu0
        %v1617 = vadd.f32 %v1567, %v1616
        %1618 = vmatmul.f32.gmra.mxu0 %v1470
        %v1619 = vpop.f32.mrf.mxu0
        %v1620 = vadd.f32 %v1567, %v1619
        %1621 = vmatmul.f32.gmra.mxu0 %v1473
        %v1622 = vpop.f32.mrf.mxu0
        %v1623 = vadd.f32 %v1567, %v1622
        %1624 = vmatmul.f32.gmra.mxu0 %v1476
        %v1625 = vpop.f32.mrf.mxu0
        %v1626 = vadd.f32 %v1567, %v1625
        %1627 = vmatmul.f32.gmra.mxu0 %v1479
        %v1628 = vpop.f32.mrf.mxu0
        %v1629 = vadd.f32 %v1567, %v1628
        %1630 = vmatmul.f32.gmra.mxu0 %v1482
        %v1631 = vpop.f32.mrf.mxu0
        %v1632 = vadd.f32 %v1567, %v1631
        %1633 = vmatmul.f32.gmra.mxu0 %v1502
        %v1634 = vpop.f32.mrf.mxu0
        %v1635 = vadd.f32 %v1567, %v1634
        %1636 = vmatmul.f32.gmra.mxu0 %v1505
        %v1637 = vpop.f32.mrf.mxu0
        %v1638 = vadd.f32 %v1567, %v1637
        %1639 = vmatmul.f32.gmra.mxu0 %v1508
        %v1640 = vpop.f32.mrf.mxu0
        %v1641 = vadd.f32 %v1567, %v1640
        %1642 = vmatmul.f32.gmra.mxu0 %v1511
        %v1643 = vpop.f32.mrf.mxu0
        %v1644 = vadd.f32 %v1567, %v1643
        %1645 = vmatmul.f32.gmra.mxu0 %v1514
        %v1646 = vpop.f32.mrf.mxu0
        %v1647 = vadd.f32 %v1567, %v1646
        %1648 = vmatmul.f32.gmra.mxu0 %v1517
        %v1649 = vpop.f32.mrf.mxu0
        %v1650 = vadd.f32 %v1567, %v1649
        %1651 = vmatmul.f32.gmra.mxu0 %v1520
        %v1652 = vpop.f32.mrf.mxu0
        %v1653 = vadd.f32 %v1567, %v1652
        %1654 = vmatmul.f32.gmra.mxu0 %v1523
        %v1655 = vpop.f32.mrf.mxu0
        %v1656 = vadd.f32 %v1567, %v1655
        %1657 = vmatmul.f32.gmra.mxu0 %v1526
        %v1658 = vpop.f32.mrf.mxu0
        %v1659 = vadd.f32 %v1567, %v1658
        %1660 = vmatmul.f32.gmra.mxu0 %v1529
        %v1661 = vpop.f32.mrf.mxu0
        %v1662 = vadd.f32 %v1567, %v1661
        %1663 = vmatmul.f32.gmra.mxu0 %v1532
        %v1664 = vpop.f32.mrf.mxu0
        %v1665 = vadd.f32 %v1567, %v1664
        %1666 = vmatmul.f32.gmra.mxu0 %v1535
        %v1667 = vpop.f32.mrf.mxu0
        %v1668 = vadd.f32 %v1567, %v1667
        %1669 = vmatmul.f32.gmra.mxu0 %v1538
        %v1670 = vpop.f32.mrf.mxu0
        %v1671 = vadd.f32 %v1567, %v1670
        %1672 = vmatmul.f32.gmra.mxu0 %v1541
        %v1673 = vpop.f32.mrf.mxu0
        %v1674 = vadd.f32 %v1567, %v1673
        %1675 = vmatmul.f32.gmra.mxu0 %v1544
        %v1676 = vpop.f32.mrf.mxu0
        %v1677 = vadd.f32 %v1567, %v1676
        %1678 = vmatmul.f32.gmra.mxu0 %v1547
        %v1679 = vpop.f32.mrf.mxu0
        %v1680 = vadd.f32 %v1567, %v1679
        %1681 = vdwg.mxu0
        %v1682 = vmax.f32 %v1587, 0.0
        %v1683 = vmax.f32 %v1590, 0.0
        %v1684 = vmax.f32 %v1593, 0.0
        %v1685 = vmax.f32 %v1596, 0.0
        %v1686 = vmax.f32 %v1599, 0.0
        %v1687 = vmax.f32 %v1602, 0.0
        %v1688 = vmax.f32 %v1605, 0.0
        %v1689 = vmax.f32 %v1608, 0.0
        %v1690 = vmax.f32 %v1611, 0.0
        %v1691 = vmax.f32 %v1614, 0.0
        %v1692 = vmax.f32 %v1617, 0.0
        %v1693 = vmax.f32 %v1620, 0.0
        %v1694 = vmax.f32 %v1623, 0.0
        %v1695 = vmax.f32 %v1626, 0.0
        %v1696 = vmax.f32 %v1629, 0.0
        %v1697 = vmax.f32 %v1632, 0.0
        %v1698 = vmax.f32 %v1635, 0.0
        %v1699 = vmax.f32 %v1638, 0.0
        %v1700 = vmax.f32 %v1641, 0.0
        %v1701 = vmax.f32 %v1644, 0.0
        %v1702 = vmax.f32 %v1647, 0.0
        %v1703 = vmax.f32 %v1650, 0.0
        %v1704 = vmax.f32 %v1653, 0.0
        %v1705 = vmax.f32 %v1656, 0.0
        %v1706 = vmax.f32 %v1659, 0.0
        %v1707 = vmax.f32 %v1662, 0.0
        %v1708 = vmax.f32 %v1665, 0.0
        %v1709 = vmax.f32 %v1668, 0.0
        %v1710 = vmax.f32 %v1671, 0.0
        %v1711 = vmax.f32 %v1674, 0.0
        %v1712 = vmax.f32 %v1677, 0.0
        %v1713 = vmax.f32 %v1680, 0.0
        %s1714 = scalar_lea.vmem [#allocation11], 128
        %v1715 = vld [vmem:[%s1714] sm:$0xff]
        %v1716 = vld [vmem:[%s1714 + $0x8] sm:$0xff]
        %v1717 = vld [vmem:[%s1714 + $0x10] sm:$0xff]
        %v1718 = vld [vmem:[%s1714 + $0x18] sm:$0xff]
        %v1719 = vld [vmem:[%s1714 + $0x20] sm:$0xff]
        %v1720 = vld [vmem:[%s1714 + $0x28] sm:$0xff]
        %v1721 = vld [vmem:[%s1714 + $0x30] sm:$0xff]
        %v1722 = vld [vmem:[%s1714 + $0x38] sm:$0xff]
        %v1723 = vld [vmem:[%s1714 + $0x40] sm:$0xff]
        %v1724 = vld [vmem:[%s1714 + $0x48] sm:$0xff]
        %v1725 = vld [vmem:[%s1714 + $0x50] sm:$0xff]
        %v1726 = vld [vmem:[%s1714 + $0x58] sm:$0xff]
        %v1727 = vld [vmem:[%s1714 + $0x60] sm:$0xff]
        %v1728 = vld [vmem:[%s1714 + $0x68] sm:$0xff]
        %v1729 = vld [vmem:[%s1714 + $0x70] sm:$0xff]
        %v1730 = vld [vmem:[%s1714 + $0x78] sm:$0xff]
        %s1731 = scalar_lea.vmem %s7, 1
        %v1732 = vld [vmem:[%s1731] sm:$0x1]
        %v1734 = vperm.slane %v1732, 0
        %1736 = vmatpush.msra.mxu0 %v1730
        %1737 = vmatpush.msra.mxu0 %v1729
        %1738 = vmatpush.msra.mxu0 %v1728
        %1739 = vmatpush.msra.mxu0 %v1727
        %1740 = vmatpush.msra.mxu0 %v1726
        %1741 = vmatpush.msra.mxu0 %v1725
        %1742 = vmatpush.msra.mxu0 %v1724
        %1743 = vmatpush.msra.mxu0 %v1723
        %1744 = vmatpush.msra.mxu0 %v1722
        %1745 = vmatpush.msra.mxu0 %v1721
        %1746 = vmatpush.msra.mxu0 %v1720
        %1747 = vmatpush.msra.mxu0 %v1719
        %1748 = vmatpush.msra.mxu0 %v1718
        %1749 = vmatpush.msra.mxu0 %v1717
        %1750 = vmatpush.msra.mxu0 %v1716
        %1751 = vmatpush.msra.mxu0 %v1715
        %1752 = vmatmul.f32.gmra.mxu0 %v1682
        %v1753 = vpop.f32.mrf.mxu0
        %v1754 = vadd.f32 %v1734, %v1753
        %1755 = vmatmul.f32.gmra.mxu0 %v1683
        %v1756 = vpop.f32.mrf.mxu0
        %v1757 = vadd.f32 %v1734, %v1756
        %1758 = vmatmul.f32.gmra.mxu0 %v1684
        %v1759 = vpop.f32.mrf.mxu0
        %v1760 = vadd.f32 %v1734, %v1759
        %1761 = vmatmul.f32.gmra.mxu0 %v1685
        %v1762 = vpop.f32.mrf.mxu0
        %v1763 = vadd.f32 %v1734, %v1762
        %1764 = vmatmul.f32.gmra.mxu0 %v1686
        %v1765 = vpop.f32.mrf.mxu0
        %v1766 = vadd.f32 %v1734, %v1765
        %1767 = vmatmul.f32.gmra.mxu0 %v1687
        %v1768 = vpop.f32.mrf.mxu0
        %v1769 = vadd.f32 %v1734, %v1768
        %1770 = vmatmul.f32.gmra.mxu0 %v1688
        %v1771 = vpop.f32.mrf.mxu0
        %v1772 = vadd.f32 %v1734, %v1771
        %1773 = vmatmul.f32.gmra.mxu0 %v1689
        %v1774 = vpop.f32.mrf.mxu0
        %v1775 = vadd.f32 %v1734, %v1774
        %1776 = vmatmul.f32.gmra.mxu0 %v1690
        %v1777 = vpop.f32.mrf.mxu0
        %v1778 = vadd.f32 %v1734, %v1777
        %1779 = vmatmul.f32.gmra.mxu0 %v1691
        %v1780 = vpop.f32.mrf.mxu0
        %v1781 = vadd.f32 %v1734, %v1780
        %1782 = vmatmul.f32.gmra.mxu0 %v1692
        %v1783 = vpop.f32.mrf.mxu0
        %v1784 = vadd.f32 %v1734, %v1783
        %1785 = vmatmul.f32.gmra.mxu0 %v1693
        %v1786 = vpop.f32.mrf.mxu0
        %v1787 = vadd.f32 %v1734, %v1786
        %1788 = vmatmul.f32.gmra.mxu0 %v1694
        %v1789 = vpop.f32.mrf.mxu0
        %v1790 = vadd.f32 %v1734, %v1789
        %1791 = vmatmul.f32.gmra.mxu0 %v1695
        %v1792 = vpop.f32.mrf.mxu0
        %v1793 = vadd.f32 %v1734, %v1792
        %1794 = vmatmul.f32.gmra.mxu0 %v1696
        %v1795 = vpop.f32.mrf.mxu0
        %v1796 = vadd.f32 %v1734, %v1795
        %1797 = vmatmul.f32.gmra.mxu0 %v1697
        %v1798 = vpop.f32.mrf.mxu0
        %v1799 = vadd.f32 %v1734, %v1798
        %1800 = vmatmul.f32.gmra.mxu0 %v1698
        %v1801 = vpop.f32.mrf.mxu0
        %v1802 = vadd.f32 %v1734, %v1801
        %1803 = vmatmul.f32.gmra.mxu0 %v1699
        %v1804 = vpop.f32.mrf.mxu0
        %v1805 = vadd.f32 %v1734, %v1804
        %1806 = vmatmul.f32.gmra.mxu0 %v1700
        %v1807 = vpop.f32.mrf.mxu0
        %v1808 = vadd.f32 %v1734, %v1807
        %1809 = vmatmul.f32.gmra.mxu0 %v1701
        %v1810 = vpop.f32.mrf.mxu0
        %v1811 = vadd.f32 %v1734, %v1810
        %1812 = vmatmul.f32.gmra.mxu0 %v1702
        %v1813 = vpop.f32.mrf.mxu0
        %v1814 = vadd.f32 %v1734, %v1813
        %1815 = vmatmul.f32.gmra.mxu0 %v1703
        %v1816 = vpop.f32.mrf.mxu0
        %v1817 = vadd.f32 %v1734, %v1816
        %1818 = vmatmul.f32.gmra.mxu0 %v1704
        %v1819 = vpop.f32.mrf.mxu0
        %v1820 = vadd.f32 %v1734, %v1819
        %1821 = vmatmul.f32.gmra.mxu0 %v1705
        %v1822 = vpop.f32.mrf.mxu0
        %v1823 = vadd.f32 %v1734, %v1822
        %1824 = vmatmul.f32.gmra.mxu0 %v1706
        %v1825 = vpop.f32.mrf.mxu0
        %v1826 = vadd.f32 %v1734, %v1825
        %1827 = vmatmul.f32.gmra.mxu0 %v1707
        %v1828 = vpop.f32.mrf.mxu0
        %v1829 = vadd.f32 %v1734, %v1828
        %1830 = vmatmul.f32.gmra.mxu0 %v1708
        %v1831 = vpop.f32.mrf.mxu0
        %v1832 = vadd.f32 %v1734, %v1831
        %1833 = vmatmul.f32.gmra.mxu0 %v1709
        %v1834 = vpop.f32.mrf.mxu0
        %v1835 = vadd.f32 %v1734, %v1834
        %1836 = vmatmul.f32.gmra.mxu0 %v1710
        %v1837 = vpop.f32.mrf.mxu0
        %v1838 = vadd.f32 %v1734, %v1837
        %1839 = vmatmul.f32.gmra.mxu0 %v1711
        %v1840 = vpop.f32.mrf.mxu0
        %v1841 = vadd.f32 %v1734, %v1840
        %1842 = vmatmul.f32.gmra.mxu0 %v1712
        %v1843 = vpop.f32.mrf.mxu0
        %v1844 = vadd.f32 %v1734, %v1843
        %1845 = vmatmul.f32.gmra.mxu0 %v1713
        %v1846 = vpop.f32.mrf.mxu0
        %v1847 = vadd.f32 %v1734, %v1846
        %1848 = vdwg.mxu0
        %v1849 = vmax.f32 %v1754, 0.0
        %v1850 = vmax.f32 %v1757, 0.0
        %v1851 = vmax.f32 %v1760, 0.0
        %v1852 = vmax.f32 %v1763, 0.0
        %v1853 = vmax.f32 %v1766, 0.0
        %v1854 = vmax.f32 %v1769, 0.0
        %v1855 = vmax.f32 %v1772, 0.0
        %v1856 = vmax.f32 %v1775, 0.0
        %v1857 = vmax.f32 %v1778, 0.0
        %v1858 = vmax.f32 %v1781, 0.0
        %v1859 = vmax.f32 %v1784, 0.0
        %v1860 = vmax.f32 %v1787, 0.0
        %v1861 = vmax.f32 %v1790, 0.0
        %v1862 = vmax.f32 %v1793, 0.0
        %v1863 = vmax.f32 %v1796, 0.0
        %v1864 = vmax.f32 %v1799, 0.0
        %v1865 = vmax.f32 %v1802, 0.0
        %v1866 = vmax.f32 %v1805, 0.0
        %v1867 = vmax.f32 %v1808, 0.0
        %v1868 = vmax.f32 %v1811, 0.0
        %v1869 = vmax.f32 %v1814, 0.0
        %v1870 = vmax.f32 %v1817, 0.0
        %v1871 = vmax.f32 %v1820, 0.0
        %v1872 = vmax.f32 %v1823, 0.0
        %v1873 = vmax.f32 %v1826, 0.0
        %v1874 = vmax.f32 %v1829, 0.0
        %v1875 = vmax.f32 %v1832, 0.0
        %v1876 = vmax.f32 %v1835, 0.0
        %v1877 = vmax.f32 %v1838, 0.0
        %v1878 = vmax.f32 %v1841, 0.0
        %v1879 = vmax.f32 %v1844, 0.0
        %v1880 = vmax.f32 %v1847, 0.0
        %s1881 = scalar_lea.vmem [#allocation11], 256
        %v1882 = vld [vmem:[%s1881] sm:$0xff]
        %v1883 = vld [vmem:[%s1881 + $0x8] sm:$0xff]
        %v1884 = vld [vmem:[%s1881 + $0x10] sm:$0xff]
        %v1885 = vld [vmem:[%s1881 + $0x18] sm:$0xff]
        %v1886 = vld [vmem:[%s1881 + $0x20] sm:$0xff]
        %v1887 = vld [vmem:[%s1881 + $0x28] sm:$0xff]
        %v1888 = vld [vmem:[%s1881 + $0x30] sm:$0xff]
        %v1889 = vld [vmem:[%s1881 + $0x38] sm:$0xff]
        %v1890 = vld [vmem:[%s1881 + $0x40] sm:$0xff]
        %v1891 = vld [vmem:[%s1881 + $0x48] sm:$0xff]
        %v1892 = vld [vmem:[%s1881 + $0x50] sm:$0xff]
        %v1893 = vld [vmem:[%s1881 + $0x58] sm:$0xff]
        %v1894 = vld [vmem:[%s1881 + $0x60] sm:$0xff]
        %v1895 = vld [vmem:[%s1881 + $0x68] sm:$0xff]
        %v1896 = vld [vmem:[%s1881 + $0x70] sm:$0xff]
        %v1897 = vld [vmem:[%s1881 + $0x78] sm:$0xff]
        %s1898 = scalar_lea.vmem %s7, 2
        %v1899 = vld [vmem:[%s1898] sm:$0x1]
        %v1901 = vperm.slane %v1899, 0
        %1903 = vmatpush.msra.mxu0 %v1897
        %1904 = vmatpush.msra.mxu0 %v1896
        %1905 = vmatpush.msra.mxu0 %v1895
        %1906 = vmatpush.msra.mxu0 %v1894
        %1907 = vmatpush.msra.mxu0 %v1893
        %1908 = vmatpush.msra.mxu0 %v1892
        %1909 = vmatpush.msra.mxu0 %v1891
        %1910 = vmatpush.msra.mxu0 %v1890
        %1911 = vmatpush.msra.mxu0 %v1889
        %1912 = vmatpush.msra.mxu0 %v1888
        %1913 = vmatpush.msra.mxu0 %v1887
        %1914 = vmatpush.msra.mxu0 %v1886
        %1915 = vmatpush.msra.mxu0 %v1885
        %1916 = vmatpush.msra.mxu0 %v1884
        %1917 = vmatpush.msra.mxu0 %v1883
        %1918 = vmatpush.msra.mxu0 %v1882
        %1919 = vmatmul.f32.gmra.mxu0 %v1849
        %v1920 = vpop.f32.mrf.mxu0
        %v1921 = vadd.f32 %v1901, %v1920
        %1922 = vmatmul.f32.gmra.mxu0 %v1850
        %v1923 = vpop.f32.mrf.mxu0
        %v1924 = vadd.f32 %v1901, %v1923
        %1925 = vmatmul.f32.gmra.mxu0 %v1851
        %v1926 = vpop.f32.mrf.mxu0
        %v1927 = vadd.f32 %v1901, %v1926
        %1928 = vmatmul.f32.gmra.mxu0 %v1852
        %v1929 = vpop.f32.mrf.mxu0
        %v1930 = vadd.f32 %v1901, %v1929
        %1931 = vmatmul.f32.gmra.mxu0 %v1853
        %v1932 = vpop.f32.mrf.mxu0
        %v1933 = vadd.f32 %v1901, %v1932
        %1934 = vmatmul.f32.gmra.mxu0 %v1854
        %v1935 = vpop.f32.mrf.mxu0
        %v1936 = vadd.f32 %v1901, %v1935
        %1937 = vmatmul.f32.gmra.mxu0 %v1855
        %v1938 = vpop.f32.mrf.mxu0
        %v1939 = vadd.f32 %v1901, %v1938
        %1940 = vmatmul.f32.gmra.mxu0 %v1856
        %v1941 = vpop.f32.mrf.mxu0
        %v1942 = vadd.f32 %v1901, %v1941
        %1943 = vmatmul.f32.gmra.mxu0 %v1857
        %v1944 = vpop.f32.mrf.mxu0
        %v1945 = vadd.f32 %v1901, %v1944
        %1946 = vmatmul.f32.gmra.mxu0 %v1858
        %v1947 = vpop.f32.mrf.mxu0
        %v1948 = vadd.f32 %v1901, %v1947
        %1949 = vmatmul.f32.gmra.mxu0 %v1859
        %v1950 = vpop.f32.mrf.mxu0
        %v1951 = vadd.f32 %v1901, %v1950
        %1952 = vmatmul.f32.gmra.mxu0 %v1860
        %v1953 = vpop.f32.mrf.mxu0
        %v1954 = vadd.f32 %v1901, %v1953
        %1955 = vmatmul.f32.gmra.mxu0 %v1861
        %v1956 = vpop.f32.mrf.mxu0
        %v1957 = vadd.f32 %v1901, %v1956
        %1958 = vmatmul.f32.gmra.mxu0 %v1862
        %v1959 = vpop.f32.mrf.mxu0
        %v1960 = vadd.f32 %v1901, %v1959
        %1961 = vmatmul.f32.gmra.mxu0 %v1863
        %v1962 = vpop.f32.mrf.mxu0
        %v1963 = vadd.f32 %v1901, %v1962
        %1964 = vmatmul.f32.gmra.mxu0 %v1864
        %v1965 = vpop.f32.mrf.mxu0
        %v1966 = vadd.f32 %v1901, %v1965
        %1967 = vmatmul.f32.gmra.mxu0 %v1865
        %v1968 = vpop.f32.mrf.mxu0
        %v1969 = vadd.f32 %v1901, %v1968
        %1970 = vmatmul.f32.gmra.mxu0 %v1866
        %v1971 = vpop.f32.mrf.mxu0
        %v1972 = vadd.f32 %v1901, %v1971
        %1973 = vmatmul.f32.gmra.mxu0 %v1867
        %v1974 = vpop.f32.mrf.mxu0
        %v1975 = vadd.f32 %v1901, %v1974
        %1976 = vmatmul.f32.gmra.mxu0 %v1868
        %v1977 = vpop.f32.mrf.mxu0
        %v1978 = vadd.f32 %v1901, %v1977
        %1979 = vmatmul.f32.gmra.mxu0 %v1869
        %v1980 = vpop.f32.mrf.mxu0
        %v1981 = vadd.f32 %v1901, %v1980
        %1982 = vmatmul.f32.gmra.mxu0 %v1870
        %v1983 = vpop.f32.mrf.mxu0
        %v1984 = vadd.f32 %v1901, %v1983
        %1985 = vmatmul.f32.gmra.mxu0 %v1871
        %v1986 = vpop.f32.mrf.mxu0
        %v1987 = vadd.f32 %v1901, %v1986
        %1988 = vmatmul.f32.gmra.mxu0 %v1872
        %v1989 = vpop.f32.mrf.mxu0
        %v1990 = vadd.f32 %v1901, %v1989
        %1991 = vmatmul.f32.gmra.mxu0 %v1873
        %v1992 = vpop.f32.mrf.mxu0
        %v1993 = vadd.f32 %v1901, %v1992
        %1994 = vmatmul.f32.gmra.mxu0 %v1874
        %v1995 = vpop.f32.mrf.mxu0
        %v1996 = vadd.f32 %v1901, %v1995
        %1997 = vmatmul.f32.gmra.mxu0 %v1875
        %v1998 = vpop.f32.mrf.mxu0
        %v1999 = vadd.f32 %v1901, %v1998
        %2000 = vmatmul.f32.gmra.mxu0 %v1876
        %v2001 = vpop.f32.mrf.mxu0
        %v2002 = vadd.f32 %v1901, %v2001
        %2003 = vmatmul.f32.gmra.mxu0 %v1877
        %v2004 = vpop.f32.mrf.mxu0
        %v2005 = vadd.f32 %v1901, %v2004
        %2006 = vmatmul.f32.gmra.mxu0 %v1878
        %v2007 = vpop.f32.mrf.mxu0
        %v2008 = vadd.f32 %v1901, %v2007
        %2009 = vmatmul.f32.gmra.mxu0 %v1879
        %v2010 = vpop.f32.mrf.mxu0
        %v2011 = vadd.f32 %v1901, %v2010
        %2012 = vmatmul.f32.gmra.mxu0 %v1880
        %v2013 = vpop.f32.mrf.mxu0
        %v2014 = vadd.f32 %v1901, %v2013
        %2015 = vdwg.mxu0
        %v2016 = vmax.f32 %v1921, 0.0
        %v2017 = vmax.f32 %v1924, 0.0
        %v2018 = vmax.f32 %v1927, 0.0
        %v2019 = vmax.f32 %v1930, 0.0
        %v2020 = vmax.f32 %v1933, 0.0
        %v2021 = vmax.f32 %v1936, 0.0
        %v2022 = vmax.f32 %v1939, 0.0
        %v2023 = vmax.f32 %v1942, 0.0
        %v2024 = vmax.f32 %v1945, 0.0
        %v2025 = vmax.f32 %v1948, 0.0
        %v2026 = vmax.f32 %v1951, 0.0
        %v2027 = vmax.f32 %v1954, 0.0
        %v2028 = vmax.f32 %v1957, 0.0
        %v2029 = vmax.f32 %v1960, 0.0
        %v2030 = vmax.f32 %v1963, 0.0
        %v2031 = vmax.f32 %v1966, 0.0
        %v2032 = vmax.f32 %v1969, 0.0
        %v2033 = vmax.f32 %v1972, 0.0
        %v2034 = vmax.f32 %v1975, 0.0
        %v2035 = vmax.f32 %v1978, 0.0
        %v2036 = vmax.f32 %v1981, 0.0
        %v2037 = vmax.f32 %v1984, 0.0
        %v2038 = vmax.f32 %v1987, 0.0
        %v2039 = vmax.f32 %v1990, 0.0
        %v2040 = vmax.f32 %v1993, 0.0
        %v2041 = vmax.f32 %v1996, 0.0
        %v2042 = vmax.f32 %v1999, 0.0
        %v2043 = vmax.f32 %v2002, 0.0
        %v2044 = vmax.f32 %v2005, 0.0
        %v2045 = vmax.f32 %v2008, 0.0
        %v2046 = vmax.f32 %v2011, 0.0
        %v2047 = vmax.f32 %v2014, 0.0
        %2048 = vst [vmem:[%s464] sm:$0xff] %v2016
        %2049 = vst [vmem:[%s464 + $0x8] sm:$0xff] %v2017
        %2050 = vst [vmem:[%s464 + $0x10] sm:$0xff] %v2018
        %2051 = vst [vmem:[%s464 + $0x18] sm:$0xff] %v2019
        %2052 = vst [vmem:[%s464 + $0x20] sm:$0xff] %v2020
        %2053 = vst [vmem:[%s464 + $0x28] sm:$0xff] %v2021
        %2054 = vst [vmem:[%s464 + $0x30] sm:$0xff] %v2022
        %2055 = vst [vmem:[%s464 + $0x38] sm:$0xff] %v2023
        %2056 = vst [vmem:[%s464 + $0x40] sm:$0xff] %v2024
        %2057 = vst [vmem:[%s464 + $0x48] sm:$0xff] %v2025
        %2058 = vst [vmem:[%s464 + $0x50] sm:$0xff] %v2026
        %2059 = vst [vmem:[%s464 + $0x58] sm:$0xff] %v2027
        %2060 = vst [vmem:[%s464 + $0x60] sm:$0xff] %v2028
        %2061 = vst [vmem:[%s464 + $0x68] sm:$0xff] %v2029
        %2062 = vst [vmem:[%s464 + $0x70] sm:$0xff] %v2030
        %2063 = vst [vmem:[%s464 + $0x78] sm:$0xff] %v2031
        %2064 = vst [vmem:[%s464 + $0x80] sm:$0xff] %v2032
        %2065 = vst [vmem:[%s464 + $0x88] sm:$0xff] %v2033
        %2066 = vst [vmem:[%s464 + $0x90] sm:$0xff] %v2034
        %2067 = vst [vmem:[%s464 + $0x98] sm:$0xff] %v2035
        %2068 = vst [vmem:[%s464 + $0xa0] sm:$0xff] %v2036
        %2069 = vst [vmem:[%s464 + $0xa8] sm:$0xff] %v2037
        %2070 = vst [vmem:[%s464 + $0xb0] sm:$0xff] %v2038
        %2071 = vst [vmem:[%s464 + $0xb8] sm:$0xff] %v2039
        %2072 = vst [vmem:[%s464 + $0xc0] sm:$0xff] %v2040
        %2073 = vst [vmem:[%s464 + $0xc8] sm:$0xff] %v2041
        %2074 = vst [vmem:[%s464 + $0xd0] sm:$0xff] %v2042
        %2075 = vst [vmem:[%s464 + $0xd8] sm:$0xff] %v2043
        %2076 = vst [vmem:[%s464 + $0xe0] sm:$0xff] %v2044
        %2077 = vst [vmem:[%s464 + $0xe8] sm:$0xff] %v2045
        %2078 = vst [vmem:[%s464 + $0xf0] sm:$0xff] %v2046
        %2079 = vst [vmem:[%s464 + $0xf8] sm:$0xff] %v2047
        %s2080 = sand.u32 %s221, 1
        %s2081 = scalar_lea.sflag [#allocation4], %s2080
        %s2082 = sand.u32 %s221, 1
        %s2083 = smul.addr %s2082, 256
        %s2084 = scalar_lea.vmem [#allocation13], %s2083
        %s2085 = sand.u32 %s247, 1
        %s2086 = scalar_lea.sflag [#allocation15], %s2085
        %s2087 = sand.u32 %s247, 1
        %s2088 = smul.addr %s2087, 256
        %s2089 = scalar_lea.vmem [#allocation14], %s2088
        // Predicated region
        $region77: #{tpu_custom_call.1} parent=51 // pred_check
          %p2090 = pneg %p231
        $region78: #{tpu_custom_call.1} parent=51 // pred_check_branch
          %2092 = sbr.rel (%p2090) target = $region80
        $region79: #{tpu_custom_call.1} parent=51 // pred_region
          %s2093 = smul.u32 2, %s35
          %2095 = vsyncadd %s2081, 0
          %s2096 = smul.addr %s2093, 16
          %s2097 = smul.addr %s2096, 8
          %s2098 = scalar_lea.hbm %s8, %s2097
          %s2099 = sshll.u32 %s2084, 4
          %s2100 = int_to_ptr.vmem [resolvable:$true] %s2099
          %s2101 = sshll.u32 %s2098, 4
          %s2102 = int_to_ptr.hbm [resolvable:$true] %s2101
          %2107 = dma.vmem_to_hbm [thread:$0]  %s2100, 4096, %s2102, %s2081, 128, 128, 8
        $region80: #{tpu_custom_call.1} parent=51 // pred_fallthru
          _
        // Predicated region
        $region81: #{tpu_custom_call.1} parent=51 // pred_check
          %p2108 = pneg %p257
        $region82: #{tpu_custom_call.1} parent=51 // pred_check_branch
          %2110 = sbr.rel (%p2108) target = $region84
        $region83: #{tpu_custom_call.1} parent=51 // pred_region
          %s2111 = smul.u32 2, %s35
          %2113 = vsyncadd %s2086, 0
          %s2114 = smul.addr %s2111, 16
          %s2115 = smul.addr %s2114, 8
          %s2116 = scalar_lea.hbm %s9, %s2115
          %s2117 = sshll.u32 %s2089, 4
          %s2118 = int_to_ptr.vmem [resolvable:$true] %s2117
          %s2119 = sshll.u32 %s2116, 4
          %s2120 = int_to_ptr.hbm [resolvable:$true] %s2119
          %2125 = dma.vmem_to_hbm [thread:$0]  %s2118, 4096, %s2120, %s2086, 128, 128, 8
        $region84: #{tpu_custom_call.1} parent=51 // pred_fallthru
          _
      $region52: #{tpu_custom_call.1} parent=5 // pred_fallthru
        _
      %p2126 = scmp.le.s32.totalorder 2, %s30
      // Predicated region
      $region85: #{tpu_custom_call.1} parent=5 // pred_check
        %p2127 = pneg %p2126
      $region86: #{tpu_custom_call.1} parent=5 // pred_check_branch
        %2129 = sbr.rel (%p2127) target = $region88
      $region87: #{tpu_custom_call.1} parent=5 // pred_region
        %s2130 = ssub.s32 %s30, 2
        // Predicated region
        $region89: #{tpu_custom_call.1} parent=87 // pred_check
          %p2131 = pneg %p237
        $region90: #{tpu_custom_call.1} parent=87 // pred_check_branch
          %2133 = sbr.rel (%p2131) target = $region92
        $region91: #{tpu_custom_call.1} parent=87 // pred_region
          %s2134 = sand.u32 %s222, 1
          %s2135 = scalar_lea.sflag [#allocation4], %s2134
          %s2136 = sand.u32 %s222, 1
          %s2137 = smul.addr %s2136, 256
          %s2138 = scalar_lea.vmem [#allocation13], %s2137
          %2140 = dma.done %s2135, 4096
        $region92: #{tpu_custom_call.1} parent=87 // pred_fallthru
          _
        // Predicated region
        $region93: #{tpu_custom_call.1} parent=87 // pred_check
          %p2141 = pneg %p263
        $region94: #{tpu_custom_call.1} parent=87 // pred_check_branch
          %2143 = sbr.rel (%p2141) target = $region96
        $region95: #{tpu_custom_call.1} parent=87 // pred_region
          %s2144 = sand.u32 %s248, 1
          %s2145 = scalar_lea.sflag [#allocation15], %s2144
          %s2146 = sand.u32 %s248, 1
          %s2147 = smul.addr %s2146, 256
          %s2148 = scalar_lea.vmem [#allocation14], %s2147
          %2150 = dma.done %s2145, 4096
        $region96: #{tpu_custom_call.1} parent=87 // pred_fallthru
          _
      $region88: #{tpu_custom_call.1} parent=5 // pred_fallthru
        _
    $region6: #{tpu_custom_call.1} parent=1 // loop_footer
      %s34 = sadd.s32 1, %s30
    $region7: #{tpu_custom_call.1} parent=1 // loop_footer_branch
      %29 = sbr.rel target = $region3
    $region8: #{tpu_custom_call.1} parent=1 // loop_exit
      _
    %2151 = vsyncpa [#allocation3], 1
    %s2152 = scalar_lea.sflag [#allocation3], 1
    %2153 = vsyncpa %s2152, 1
    %2154 = vsyncpa [#allocation6], 1
    %s2155 = scalar_lea.sflag [#allocation6], 1
    %2156 = vsyncpa %s2155, 1
    %2157 = vsyncpa [#allocation9], 1
    %2158 = vsyncpa [#allocation12], 1
    %2159 = vsyncpa [#allocation4], 1
    %s2160 = scalar_lea.sflag [#allocation4], 1
    %2161 = vsyncpa %s2160, 1
    %2162 = vsyncpa [#allocation15], 1
    %s2163 = scalar_lea.sflag [#allocation15], 1
    %2164 = vsyncpa %s2163, 1

</llo_original>
